<compile_context>
chip_gen: v7x
topology: tpu7x:2x2x1
jax: 0.10.0
libtpu: 0.0.40
codegen_flags: <defaults>
</compile_context>

<pallas_src>
import jax
import jax.numpy as jnp
from jax.experimental import pallas as pl
from jax.experimental.pallas import tpu as pltpu


def _phase_off(d):
    # padded index 2*i + d  ->  (phase, offset) into the even/odd phase blocks:
    #   d=0 -> even phase, offset 0 ; d=1 -> odd phase, offset 0 ; d=2 -> even phase, offset 1
    return d % 2, d // 2


# ---------------------------------------------------------------------------
# Fused SepConv kernel (one grid step = one batch element).
# ---------------------------------------------------------------------------
def _sepconv_kernel(pee_ref, peo_ref, poe_ref, poo_ref,
                    dw1_ref, pw1_ref, b1_ref,
                    dw2_ref, pw2_ref, b2_ref,
                    out_ref, pad_ref):
    Hp2, Wp2, Cin = pad_ref.shape
    Ho, Wo = Hp2 - 2, Wp2 - 2
    N = Ho * Wo
    phases = {(0, 0): pee_ref, (0, 1): peo_ref,
              (1, 0): poe_ref, (1, 1): poo_ref}

    # ---- half 1: depthwise 3x3, stride 2 (zero padding folded into the phases) ----
    acc = None
    for dh in range(3):
        ph, oh = _phase_off(dh)
        for dw in range(3):
            pw_, ow = _phase_off(dw)
            tap = phases[(ph, pw_)][pl.ds(oh, Ho), pl.ds(ow, Wo), :]
            term = tap * dw1_ref[dh * 3 + dw]
            acc = term if acc is None else acc + term
    # pointwise 1x1 on the MXU (BN scale pre-folded into the weight columns),
    # bias add + ReLU.  bf16 operands, f32 accumulation.
    y = jnp.dot(acc.reshape(N, Cin).astype(jnp.bfloat16),
                pw1_ref[...].astype(jnp.bfloat16),
                preferred_element_type=jnp.float32)
    y = jnp.maximum(y + b1_ref[...], 0.0)

    # ---- half 2: depthwise 3x3, stride 1; zero padding via a VMEM scratch ----
    pad_ref[...] = jnp.zeros((Hp2, Wp2, Cin), jnp.float32)
    pad_ref[pl.ds(1, Ho), pl.ds(1, Wo), :] = y.reshape(Ho, Wo, Cin)
    acc2 = None
    for dh in range(3):
        for dw in range(3):
            tap = pad_ref[pl.ds(dh, Ho), pl.ds(dw, Wo), :]
            term = tap * dw2_ref[dh * 3 + dw]
            acc2 = term if acc2 is None else acc2 + term
    y2 = jnp.dot(acc2.reshape(N, Cin).astype(jnp.bfloat16),
                 pw2_ref[...].astype(jnp.bfloat16),
                 preferred_element_type=jnp.float32)
    out_ref[...] = jnp.maximum(y2 + b2_ref[...], 0.0).astype(out_ref.dtype)


# ---------------------------------------------------------------------------
# Wrapper: NCHW in / NCHW out, one pallas_call for the whole SepConv.
# ---------------------------------------------------------------------------
def sepconv_forward(params, x_nchw):
    B, Cin, H, W = x_nchw.shape
    assert H % 2 == 0 and W % 2 == 0, "spatial dims must be even (stride-2 phase split)"
    Cout = params["pw2s"].shape[1]
    Ho, Wo = H // 2, W // 2
    N = Ho * Wo

    x = jnp.transpose(x_nchw, (0, 2, 3, 1)).astype(jnp.float32)   # NCHW -> NHWC
    xp = jnp.pad(x, ((0, 0), (1, 1), (1, 1), (0, 0)))             # zero pad (Conv2d padding=1)
    # even/odd row & column phases of the padded input (~1x the input volume total)
    pee = xp[:, 0::2, 0::2, :]
    peo = xp[:, 0::2, 1::2, :]
    poe = xp[:, 1::2, 0::2, :]
    poo = xp[:, 1::2, 1::2, :]
    Hh, Wh = Ho + 1, Wo + 1                                       # = (H + 2) // 2

    phase_spec = pl.BlockSpec((None, Hh, Wh, Cin), lambda b: (b, 0, 0, 0))
    dw_spec = pl.BlockSpec((9, 1, 1, Cin), lambda b: (0, 0, 0, 0))

    out = pl.pallas_call(
        _sepconv_kernel,
        out_shape=jax.ShapeDtypeStruct((B, N, Cout), jnp.float32),
        grid=(B,),
        in_specs=[
            phase_spec, phase_spec, phase_spec, phase_spec,
            dw_spec,
            pl.BlockSpec((Cin, Cin), lambda b: (0, 0)),
            pl.BlockSpec((1, Cin), lambda b: (0, 0)),
            dw_spec,
            pl.BlockSpec((Cin, Cout), lambda b: (0, 0)),
            pl.BlockSpec((1, Cout), lambda b: (0, 0)),
        ],
        out_specs=pl.BlockSpec((None, N, Cout), lambda b: (b, 0, 0)),
        scratch_shapes=[pltpu.VMEM((Ho + 2, Wo + 2, Cin), jnp.float32)],
        compiler_params=pltpu.CompilerParams(dimension_semantics=("parallel",)),
    )(pee, peo, poe, poo,
      params["dw1"], params["pw1s"], params["b1"],
      params["dw2"], params["pw2s"], params["b2"])

    out = out.reshape(B, Ho, Wo, Cout)
    return jnp.transpose(out, (0, 3, 1, 2))                       # NHWC -> NCHW


# ---------------------------------------------------------------------------
# Deterministic synthetic parameters (inference-mode BN folded).
# ---------------------------------------------------------------------------
def _fold_bn(key, c):
    kg, kb, km, kv = jax.random.split(key, 4)
    gamma = 1.0 + 0.1 * jax.random.normal(kg, (c,), jnp.float32)
    beta = 0.1 * jax.random.normal(kb, (c,), jnp.float32)
    mean = 0.1 * jax.random.normal(km, (c,), jnp.float32)
    var = 0.5 + jax.random.uniform(kv, (c,), jnp.float32)
    scale = gamma * jax.lax.rsqrt(var + 1e-5)        # running stats (inference mode)
    bias = beta - mean * scale
    return scale, bias


def init_sepconv_params(key, cin, cout):
    k = jax.random.split(key, 6)
    dw_std = (2.0 / 9.0) ** 0.5
    dw1 = jax.random.normal(k[0], (9, 1, 1, cin), jnp.float32) * dw_std
    pw1 = jax.random.normal(k[1], (cin, cin), jnp.float32) * (2.0 / cin) ** 0.5
    dw2 = jax.random.normal(k[2], (9, 1, 1, cin), jnp.float32) * dw_std
    pw2 = jax.random.normal(k[3], (cin, cout), jnp.float32) * (2.0 / cin) ** 0.5
    s1, b1 = _fold_bn(k[4], cin)
    s2, b2 = _fold_bn(k[5], cout)
    # Fold the BN scale into the pointwise weight columns (algebraically exact);
    # the bias stays a separate in-kernel add because ReLU follows.
    return {
        "dw1": dw1, "pw1s": pw1 * s1[None, :], "b1": b1.reshape(1, cin),
        "dw2": dw2, "pw2s": pw2 * s2[None, :], "b2": b2.reshape(1, cout),
    }


if __name__ == "__main__":
    key = jax.random.PRNGKey(0)
    kp, kx = jax.random.split(key)
    B, CIN, COUT, H, W = 2, 64, 128, 16, 16
    params = init_sepconv_params(kp, CIN, COUT)
    x = jax.random.normal(kx, (B, CIN, H, W), jnp.float32)

    fwd = jax.jit(sepconv_forward)
    out = fwd(params, x)
    jax.block_until_ready(out)

    assert out.shape == (B, COUT, H // 2, W // 2), out.shape
    assert bool(jnp.all(jnp.isfinite(out)))
    print("KERNEL_OK")
</pallas_src>

<mosaic_0001>
module attributes {stable_mosaic.version = 11 : i64} {
  func.func @_sepconv_kernel(%arg0: i32, %arg1: memref<1x9x9x64xf32, #tpu.memory_space<vmem>>, %arg2: memref<1x9x9x64xf32, #tpu.memory_space<vmem>>, %arg3: memref<1x9x9x64xf32, #tpu.memory_space<vmem>>, %arg4: memref<1x9x9x64xf32, #tpu.memory_space<vmem>>, %arg5: memref<9x1x1x64xf32, #tpu.memory_space<vmem>>, %arg6: memref<64x64xf32, #tpu.memory_space<vmem>>, %arg7: memref<1x64xf32, #tpu.memory_space<vmem>>, %arg8: memref<9x1x1x64xf32, #tpu.memory_space<vmem>>, %arg9: memref<64x128xf32, #tpu.memory_space<vmem>>, %arg10: memref<1x128xf32, #tpu.memory_space<vmem>>, %arg11: memref<1x64x128xf32, #tpu.memory_space<vmem>>, %arg12: memref<10x10x64xf32, #tpu.memory_space<vmem>>) attributes {dimension_semantics = [#tpu.dimension_semantics<parallel>], iteration_bounds = array<i64: 2>, scalar_prefetch = 0 : i64, scratch_operands = 1 : i64, tpu.core_type = #tpu.core_type<tc>, window_params = [{transform_indices = @transform_0, window_bounds = array<i64: 1, 9, 9, 64>}, {transform_indices = @transform_1, window_bounds = array<i64: 1, 9, 9, 64>}, {transform_indices = @transform_2, window_bounds = array<i64: 1, 9, 9, 64>}, {transform_indices = @transform_3, window_bounds = array<i64: 1, 9, 9, 64>}, {pipeline_mode = #tpu.pipeline_mode<synchronous>, transform_indices = @transform_4, window_bounds = array<i64: 9, 1, 1, 64>}, {pipeline_mode = #tpu.pipeline_mode<synchronous>, transform_indices = @transform_5, window_bounds = array<i64: 64, 64>}, {pipeline_mode = #tpu.pipeline_mode<synchronous>, transform_indices = @transform_6, window_bounds = array<i64: 1, 64>}, {pipeline_mode = #tpu.pipeline_mode<synchronous>, transform_indices = @transform_7, window_bounds = array<i64: 9, 1, 1, 64>}, {pipeline_mode = #tpu.pipeline_mode<synchronous>, transform_indices = @transform_8, window_bounds = array<i64: 64, 128>}, {pipeline_mode = #tpu.pipeline_mode<synchronous>, transform_indices = @transform_9, window_bounds = array<i64: 1, 128>}, {transform_indices = @transform_10, window_bounds = array<i64: 1, 64, 128>}]} {
    %c0 = arith.constant 0 : index
    %c0_0 = arith.constant 0 : index
    %c0_1 = arith.constant 0 : index
    %c0_2 = arith.constant 0 : index
    %0 = vector.load %arg1[%c0, %c0_0, %c0_1, %c0_2] : memref<1x9x9x64xf32, #tpu.memory_space<vmem>>, vector<1x8x8x64xf32>
    %1 = vector.shape_cast %0 : vector<1x8x8x64xf32> to vector<8x8x64xf32>
    %c0_3 = arith.constant 0 : index
    %c0_4 = arith.constant 0 : index
    %c0_5 = arith.constant 0 : index
    %c0_6 = arith.constant 0 : index
    %2 = vector.load %arg5[%c0_3, %c0_4, %c0_5, %c0_6] : memref<9x1x1x64xf32, #tpu.memory_space<vmem>>, vector<1x1x1x64xf32>
    %3 = vector.shape_cast %2 : vector<1x1x1x64xf32> to vector<1x1x64xf32>
    %4 = vector.broadcast %3 : vector<1x1x64xf32> to vector<8x8x64xf32>
    %5 = arith.mulf %1, %4 : vector<8x8x64xf32>
    %c0_7 = arith.constant 0 : index
    %c0_8 = arith.constant 0 : index
    %c0_9 = arith.constant 0 : index
    %c0_10 = arith.constant 0 : index
    %6 = vector.load %arg2[%c0_7, %c0_8, %c0_9, %c0_10] : memref<1x9x9x64xf32, #tpu.memory_space<vmem>>, vector<1x8x8x64xf32>
    %7 = vector.shape_cast %6 : vector<1x8x8x64xf32> to vector<8x8x64xf32>
    %c1 = arith.constant 1 : index
    %c0_11 = arith.constant 0 : index
    %c0_12 = arith.constant 0 : index
    %c0_13 = arith.constant 0 : index
    %8 = vector.load %arg5[%c1, %c0_11, %c0_12, %c0_13] : memref<9x1x1x64xf32, #tpu.memory_space<vmem>>, vector<1x1x1x64xf32>
    %9 = vector.shape_cast %8 : vector<1x1x1x64xf32> to vector<1x1x64xf32>
    %10 = vector.broadcast %9 : vector<1x1x64xf32> to vector<8x8x64xf32>
    %11 = arith.mulf %7, %10 : vector<8x8x64xf32>
    %12 = arith.addf %5, %11 : vector<8x8x64xf32>
    %c0_14 = arith.constant 0 : index
    %c0_15 = arith.constant 0 : index
    %c1_16 = arith.constant 1 : index
    %c0_17 = arith.constant 0 : index
    %13 = vector.load %arg1[%c0_14, %c0_15, %c1_16, %c0_17] : memref<1x9x9x64xf32, #tpu.memory_space<vmem>>, vector<1x8x8x64xf32>
    %14 = vector.shape_cast %13 : vector<1x8x8x64xf32> to vector<8x8x64xf32>
    %c2 = arith.constant 2 : index
    %c0_18 = arith.constant 0 : index
    %c0_19 = arith.constant 0 : index
    %c0_20 = arith.constant 0 : index
    %15 = vector.load %arg5[%c2, %c0_18, %c0_19, %c0_20] : memref<9x1x1x64xf32, #tpu.memory_space<vmem>>, vector<1x1x1x64xf32>
    %16 = vector.shape_cast %15 : vector<1x1x1x64xf32> to vector<1x1x64xf32>
    %17 = vector.broadcast %16 : vector<1x1x64xf32> to vector<8x8x64xf32>
    %18 = arith.mulf %14, %17 : vector<8x8x64xf32>
    %19 = arith.addf %12, %18 : vector<8x8x64xf32>
    %c0_21 = arith.constant 0 : index
    %c0_22 = arith.constant 0 : index
    %c0_23 = arith.constant 0 : index
    %c0_24 = arith.constant 0 : index
    %20 = vector.load %arg3[%c0_21, %c0_22, %c0_23, %c0_24] : memref<1x9x9x64xf32, #tpu.memory_space<vmem>>, vector<1x8x8x64xf32>
    %21 = vector.shape_cast %20 : vector<1x8x8x64xf32> to vector<8x8x64xf32>
    %c3 = arith.constant 3 : index
    %c0_25 = arith.constant 0 : index
    %c0_26 = arith.constant 0 : index
    %c0_27 = arith.constant 0 : index
    %22 = vector.load %arg5[%c3, %c0_25, %c0_26, %c0_27] : memref<9x1x1x64xf32, #tpu.memory_space<vmem>>, vector<1x1x1x64xf32>
    %23 = vector.shape_cast %22 : vector<1x1x1x64xf32> to vector<1x1x64xf32>
    %24 = vector.broadcast %23 : vector<1x1x64xf32> to vector<8x8x64xf32>
    %25 = arith.mulf %21, %24 : vector<8x8x64xf32>
    %26 = arith.addf %19, %25 : vector<8x8x64xf32>
    %c0_28 = arith.constant 0 : index
    %c0_29 = arith.constant 0 : index
    %c0_30 = arith.constant 0 : index
    %c0_31 = arith.constant 0 : index
    %27 = vector.load %arg4[%c0_28, %c0_29, %c0_30, %c0_31] : memref<1x9x9x64xf32, #tpu.memory_space<vmem>>, vector<1x8x8x64xf32>
    %28 = vector.shape_cast %27 : vector<1x8x8x64xf32> to vector<8x8x64xf32>
    %c4 = arith.constant 4 : index
    %c0_32 = arith.constant 0 : index
    %c0_33 = arith.constant 0 : index
    %c0_34 = arith.constant 0 : index
    %29 = vector.load %arg5[%c4, %c0_32, %c0_33, %c0_34] : memref<9x1x1x64xf32, #tpu.memory_space<vmem>>, vector<1x1x1x64xf32>
    %30 = vector.shape_cast %29 : vector<1x1x1x64xf32> to vector<1x1x64xf32>
    %31 = vector.broadcast %30 : vector<1x1x64xf32> to vector<8x8x64xf32>
    %32 = arith.mulf %28, %31 : vector<8x8x64xf32>
    %33 = arith.addf %26, %32 : vector<8x8x64xf32>
    %c0_35 = arith.constant 0 : index
    %c0_36 = arith.constant 0 : index
    %c1_37 = arith.constant 1 : index
    %c0_38 = arith.constant 0 : index
    %34 = vector.load %arg3[%c0_35, %c0_36, %c1_37, %c0_38] : memref<1x9x9x64xf32, #tpu.memory_space<vmem>>, vector<1x8x8x64xf32>
    %35 = vector.shape_cast %34 : vector<1x8x8x64xf32> to vector<8x8x64xf32>
    %c5 = arith.constant 5 : index
    %c0_39 = arith.constant 0 : index
    %c0_40 = arith.constant 0 : index
    %c0_41 = arith.constant 0 : index
    %36 = vector.load %arg5[%c5, %c0_39, %c0_40, %c0_41] : memref<9x1x1x64xf32, #tpu.memory_space<vmem>>, vector<1x1x1x64xf32>
    %37 = vector.shape_cast %36 : vector<1x1x1x64xf32> to vector<1x1x64xf32>
    %38 = vector.broadcast %37 : vector<1x1x64xf32> to vector<8x8x64xf32>
    %39 = arith.mulf %35, %38 : vector<8x8x64xf32>
    %40 = arith.addf %33, %39 : vector<8x8x64xf32>
    %c0_42 = arith.constant 0 : index
    %c1_43 = arith.constant 1 : index
    %c0_44 = arith.constant 0 : index
    %c0_45 = arith.constant 0 : index
    %41 = vector.load %arg1[%c0_42, %c1_43, %c0_44, %c0_45] : memref<1x9x9x64xf32, #tpu.memory_space<vmem>>, vector<1x8x8x64xf32>
    %42 = vector.shape_cast %41 : vector<1x8x8x64xf32> to vector<8x8x64xf32>
    %c6 = arith.constant 6 : index
    %c0_46 = arith.constant 0 : index
    %c0_47 = arith.constant 0 : index
    %c0_48 = arith.constant 0 : index
    %43 = vector.load %arg5[%c6, %c0_46, %c0_47, %c0_48] : memref<9x1x1x64xf32, #tpu.memory_space<vmem>>, vector<1x1x1x64xf32>
    %44 = vector.shape_cast %43 : vector<1x1x1x64xf32> to vector<1x1x64xf32>
    %45 = vector.broadcast %44 : vector<1x1x64xf32> to vector<8x8x64xf32>
    %46 = arith.mulf %42, %45 : vector<8x8x64xf32>
    %47 = arith.addf %40, %46 : vector<8x8x64xf32>
    %c0_49 = arith.constant 0 : index
    %c1_50 = arith.constant 1 : index
    %c0_51 = arith.constant 0 : index
    %c0_52 = arith.constant 0 : index
    %48 = vector.load %arg2[%c0_49, %c1_50, %c0_51, %c0_52] : memref<1x9x9x64xf32, #tpu.memory_space<vmem>>, vector<1x8x8x64xf32>
    %49 = vector.shape_cast %48 : vector<1x8x8x64xf32> to vector<8x8x64xf32>
    %c7 = arith.constant 7 : index
    %c0_53 = arith.constant 0 : index
    %c0_54 = arith.constant 0 : index
    %c0_55 = arith.constant 0 : index
    %50 = vector.load %arg5[%c7, %c0_53, %c0_54, %c0_55] : memref<9x1x1x64xf32, #tpu.memory_space<vmem>>, vector<1x1x1x64xf32>
    %51 = vector.shape_cast %50 : vector<1x1x1x64xf32> to vector<1x1x64xf32>
    %52 = vector.broadcast %51 : vector<1x1x64xf32> to vector<8x8x64xf32>
    %53 = arith.mulf %49, %52 : vector<8x8x64xf32>
    %54 = arith.addf %47, %53 : vector<8x8x64xf32>
    %c0_56 = arith.constant 0 : index
    %c1_57 = arith.constant 1 : index
    %c1_58 = arith.constant 1 : index
    %c0_59 = arith.constant 0 : index
    %55 = vector.load %arg1[%c0_56, %c1_57, %c1_58, %c0_59] : memref<1x9x9x64xf32, #tpu.memory_space<vmem>>, vector<1x8x8x64xf32>
    %56 = vector.shape_cast %55 : vector<1x8x8x64xf32> to vector<8x8x64xf32>
    %c8 = arith.constant 8 : index
    %c0_60 = arith.constant 0 : index
    %c0_61 = arith.constant 0 : index
    %c0_62 = arith.constant 0 : index
    %57 = vector.load %arg5[%c8, %c0_60, %c0_61, %c0_62] : memref<9x1x1x64xf32, #tpu.memory_space<vmem>>, vector<1x1x1x64xf32>
    %58 = vector.shape_cast %57 : vector<1x1x1x64xf32> to vector<1x1x64xf32>
    %59 = vector.broadcast %58 : vector<1x1x64xf32> to vector<8x8x64xf32>
    %60 = arith.mulf %56, %59 : vector<8x8x64xf32>
    %61 = arith.addf %54, %60 : vector<8x8x64xf32>
    %62 = vector.shape_cast %61 : vector<8x8x64xf32> to vector<64x64xf32>
    %63 = arith.truncf %62 : vector<64x64xf32> to vector<64x64xbf16>
    %c0_63 = arith.constant 0 : index
    %c0_64 = arith.constant 0 : index
    %64 = vector.load %arg6[%c0_63, %c0_64] : memref<64x64xf32, #tpu.memory_space<vmem>>, vector<64x64xf32>
    %65 = arith.truncf %64 : vector<64x64xf32> to vector<64x64xbf16>
    %cst = arith.constant dense<0.000000e+00> : vector<64x64xf32>
    %66 = tpu.matmul %63, %65, %cst {dimension_numbers = #tpu.dot_dimension_numbers<[1], [0], [0], [1], [0, 0, 1, 1], [], []>} : vector<64x64xbf16>, vector<64x64xbf16>, vector<64x64xf32> -> vector<64x64xf32>
    %c0_65 = arith.constant 0 : index
    %c0_66 = arith.constant 0 : index
    %67 = vector.load %arg7[%c0_65, %c0_66] : memref<1x64xf32, #tpu.memory_space<vmem>>, vector<1x64xf32>
    %68 = vector.broadcast %67 : vector<1x64xf32> to vector<64x64xf32>
    %69 = arith.addf %66, %68 : vector<64x64xf32>
    %cst_67 = arith.constant 0.000000e+00 : f32
    %70 = vector.broadcast %cst_67 : f32 to vector<64x64xf32>
    %71 = arith.maximumf %69, %70 : vector<64x64xf32>
    %cst_68 = arith.constant 0.000000e+00 : f32
    %72 = vector.broadcast %cst_68 : f32 to vector<10x10x64xf32>
    %c0_69 = arith.constant 0 : index
    %c0_70 = arith.constant 0 : index
    %c0_71 = arith.constant 0 : index
    %73 = vector.load %arg12[%c0_69, %c0_70, %c0_71] : memref<10x10x64xf32, #tpu.memory_space<vmem>>, vector<10x10x64xf32>
    tpu.vector_store %arg12[%c0_69, %c0_70, %c0_71], %72 {strides = array<i32>} : memref<10x10x64xf32, #tpu.memory_space<vmem>>, vector<10x10x64xf32>,
    %74 = vector.shape_cast %71 : vector<64x64xf32> to vector<8x8x64xf32>
    %c1_72 = arith.constant 1 : index
    %c1_73 = arith.constant 1 : index
    %c0_74 = arith.constant 0 : index
    %75 = vector.load %arg12[%c1_72, %c1_73, %c0_74] : memref<10x10x64xf32, #tpu.memory_space<vmem>>, vector<8x8x64xf32>
    tpu.vector_store %arg12[%c1_72, %c1_73, %c0_74], %74 {strides = array<i32>} : memref<10x10x64xf32, #tpu.memory_space<vmem>>, vector<8x8x64xf32>,
    %c0_75 = arith.constant 0 : index
    %c0_76 = arith.constant 0 : index
    %c0_77 = arith.constant 0 : index
    %76 = vector.load %arg12[%c0_75, %c0_76, %c0_77] : memref<10x10x64xf32, #tpu.memory_space<vmem>>, vector<8x8x64xf32>
    %c0_78 = arith.constant 0 : index
    %c0_79 = arith.constant 0 : index
    %c0_80 = arith.constant 0 : index
    %c0_81 = arith.constant 0 : index
    %77 = vector.load %arg8[%c0_78, %c0_79, %c0_80, %c0_81] : memref<9x1x1x64xf32, #tpu.memory_space<vmem>>, vector<1x1x1x64xf32>
    %78 = vector.shape_cast %77 : vector<1x1x1x64xf32> to vector<1x1x64xf32>
    %79 = vector.broadcast %78 : vector<1x1x64xf32> to vector<8x8x64xf32>
    %80 = arith.mulf %76, %79 : vector<8x8x64xf32>
    %c0_82 = arith.constant 0 : index
    %c1_83 = arith.constant 1 : index
    %c0_84 = arith.constant 0 : index
    %81 = vector.load %arg12[%c0_82, %c1_83, %c0_84] : memref<10x10x64xf32, #tpu.memory_space<vmem>>, vector<8x8x64xf32>
    %c1_85 = arith.constant 1 : index
    %c0_86 = arith.constant 0 : index
    %c0_87 = arith.constant 0 : index
    %c0_88 = arith.constant 0 : index
    %82 = vector.load %arg8[%c1_85, %c0_86, %c0_87, %c0_88] : memref<9x1x1x64xf32, #tpu.memory_space<vmem>>, vector<1x1x1x64xf32>
    %83 = vector.shape_cast %82 : vector<1x1x1x64xf32> to vector<1x1x64xf32>
    %84 = vector.broadcast %83 : vector<1x1x64xf32> to vector<8x8x64xf32>
    %85 = arith.mulf %81, %84 : vector<8x8x64xf32>
    %86 = arith.addf %80, %85 : vector<8x8x64xf32>
    %c0_89 = arith.constant 0 : index
    %c2_90 = arith.constant 2 : index
    %c0_91 = arith.constant 0 : index
    %87 = vector.load %arg12[%c0_89, %c2_90, %c0_91] : memref<10x10x64xf32, #tpu.memory_space<vmem>>, vector<8x8x64xf32>
    %c2_92 = arith.constant 2 : index
    %c0_93 = arith.constant 0 : index
    %c0_94 = arith.constant 0 : index
    %c0_95 = arith.constant 0 : index
    %88 = vector.load %arg8[%c2_92, %c0_93, %c0_94, %c0_95] : memref<9x1x1x64xf32, #tpu.memory_space<vmem>>, vector<1x1x1x64xf32>
    %89 = vector.shape_cast %88 : vector<1x1x1x64xf32> to vector<1x1x64xf32>
    %90 = vector.broadcast %89 : vector<1x1x64xf32> to vector<8x8x64xf32>
    %91 = arith.mulf %87, %90 : vector<8x8x64xf32>
    %92 = arith.addf %86, %91 : vector<8x8x64xf32>
    %c1_96 = arith.constant 1 : index
    %c0_97 = arith.constant 0 : index
    %c0_98 = arith.constant 0 : index
    %93 = vector.load %arg12[%c1_96, %c0_97, %c0_98] : memref<10x10x64xf32, #tpu.memory_space<vmem>>, vector<8x8x64xf32>
    %c3_99 = arith.constant 3 : index
    %c0_100 = arith.constant 0 : index
    %c0_101 = arith.constant 0 : index
    %c0_102 = arith.constant 0 : index
    %94 = vector.load %arg8[%c3_99, %c0_100, %c0_101, %c0_102] : memref<9x1x1x64xf32, #tpu.memory_space<vmem>>, vector<1x1x1x64xf32>
    %95 = vector.shape_cast %94 : vector<1x1x1x64xf32> to vector<1x1x64xf32>
    %96 = vector.broadcast %95 : vector<1x1x64xf32> to vector<8x8x64xf32>
    %97 = arith.mulf %93, %96 : vector<8x8x64xf32>
    %98 = arith.addf %92, %97 : vector<8x8x64xf32>
    %c1_103 = arith.constant 1 : index
    %c1_104 = arith.constant 1 : index
    %c0_105 = arith.constant 0 : index
    %99 = vector.load %arg12[%c1_103, %c1_104, %c0_105] : memref<10x10x64xf32, #tpu.memory_space<vmem>>, vector<8x8x64xf32>
    %c4_106 = arith.constant 4 : index
    %c0_107 = arith.constant 0 : index
    %c0_108 = arith.constant 0 : index
    %c0_109 = arith.constant 0 : index
    %100 = vector.load %arg8[%c4_106, %c0_107, %c0_108, %c0_109] : memref<9x1x1x64xf32, #tpu.memory_space<vmem>>, vector<1x1x1x64xf32>
    %101 = vector.shape_cast %100 : vector<1x1x1x64xf32> to vector<1x1x64xf32>
    %102 = vector.broadcast %101 : vector<1x1x64xf32> to vector<8x8x64xf32>
    %103 = arith.mulf %99, %102 : vector<8x8x64xf32>
    %104 = arith.addf %98, %103 : vector<8x8x64xf32>
    %c1_110 = arith.constant 1 : index
    %c2_111 = arith.constant 2 : index
    %c0_112 = arith.constant 0 : index
    %105 = vector.load %arg12[%c1_110, %c2_111, %c0_112] : memref<10x10x64xf32, #tpu.memory_space<vmem>>, vector<8x8x64xf32>
    %c5_113 = arith.constant 5 : index
    %c0_114 = arith.constant 0 : index
    %c0_115 = arith.constant 0 : index
    %c0_116 = arith.constant 0 : index
    %106 = vector.load %arg8[%c5_113, %c0_114, %c0_115, %c0_116] : memref<9x1x1x64xf32, #tpu.memory_space<vmem>>, vector<1x1x1x64xf32>
    %107 = vector.shape_cast %106 : vector<1x1x1x64xf32> to vector<1x1x64xf32>
    %108 = vector.broadcast %107 : vector<1x1x64xf32> to vector<8x8x64xf32>
    %109 = arith.mulf %105, %108 : vector<8x8x64xf32>
    %110 = arith.addf %104, %109 : vector<8x8x64xf32>
    %c2_117 = arith.constant 2 : index
    %c0_118 = arith.constant 0 : index
    %c0_119 = arith.constant 0 : index
    %111 = vector.load %arg12[%c2_117, %c0_118, %c0_119] : memref<10x10x64xf32, #tpu.memory_space<vmem>>, vector<8x8x64xf32>
    %c6_120 = arith.constant 6 : index
    %c0_121 = arith.constant 0 : index
    %c0_122 = arith.constant 0 : index
    %c0_123 = arith.constant 0 : index
    %112 = vector.load %arg8[%c6_120, %c0_121, %c0_122, %c0_123] : memref<9x1x1x64xf32, #tpu.memory_space<vmem>>, vector<1x1x1x64xf32>
    %113 = vector.shape_cast %112 : vector<1x1x1x64xf32> to vector<1x1x64xf32>
    %114 = vector.broadcast %113 : vector<1x1x64xf32> to vector<8x8x64xf32>
    %115 = arith.mulf %111, %114 : vector<8x8x64xf32>
    %116 = arith.addf %110, %115 : vector<8x8x64xf32>
    %c2_124 = arith.constant 2 : index
    %c1_125 = arith.constant 1 : index
    %c0_126 = arith.constant 0 : index
    %117 = vector.load %arg12[%c2_124, %c1_125, %c0_126] : memref<10x10x64xf32, #tpu.memory_space<vmem>>, vector<8x8x64xf32>
    %c7_127 = arith.constant 7 : index
    %c0_128 = arith.constant 0 : index
    %c0_129 = arith.constant 0 : index
    %c0_130 = arith.constant 0 : index
    %118 = vector.load %arg8[%c7_127, %c0_128, %c0_129, %c0_130] : memref<9x1x1x64xf32, #tpu.memory_space<vmem>>, vector<1x1x1x64xf32>
    %119 = vector.shape_cast %118 : vector<1x1x1x64xf32> to vector<1x1x64xf32>
    %120 = vector.broadcast %119 : vector<1x1x64xf32> to vector<8x8x64xf32>
    %121 = arith.mulf %117, %120 : vector<8x8x64xf32>
    %122 = arith.addf %116, %121 : vector<8x8x64xf32>
    %c2_131 = arith.constant 2 : index
    %c2_132 = arith.constant 2 : index
    %c0_133 = arith.constant 0 : index
    %123 = vector.load %arg12[%c2_131, %c2_132, %c0_133] : memref<10x10x64xf32, #tpu.memory_space<vmem>>, vector<8x8x64xf32>
    %c8_134 = arith.constant 8 : index
    %c0_135 = arith.constant 0 : index
    %c0_136 = arith.constant 0 : index
    %c0_137 = arith.constant 0 : index
    %124 = vector.load %arg8[%c8_134, %c0_135, %c0_136, %c0_137] : memref<9x1x1x64xf32, #tpu.memory_space<vmem>>, vector<1x1x1x64xf32>
    %125 = vector.shape_cast %124 : vector<1x1x1x64xf32> to vector<1x1x64xf32>
    %126 = vector.broadcast %125 : vector<1x1x64xf32> to vector<8x8x64xf32>
    %127 = arith.mulf %123, %126 : vector<8x8x64xf32>
    %128 = arith.addf %122, %127 : vector<8x8x64xf32>
    %129 = vector.shape_cast %128 : vector<8x8x64xf32> to vector<64x64xf32>
    %130 = arith.truncf %129 : vector<64x64xf32> to vector<64x64xbf16>
    %c0_138 = arith.constant 0 : index
    %c0_139 = arith.constant 0 : index
    %131 = vector.load %arg9[%c0_138, %c0_139] : memref<64x128xf32, #tpu.memory_space<vmem>>, vector<64x128xf32>
    %132 = arith.truncf %131 : vector<64x128xf32> to vector<64x128xbf16>
    %cst_140 = arith.constant dense<0.000000e+00> : vector<64x128xf32>
    %133 = tpu.matmul %130, %132, %cst_140 {dimension_numbers = #tpu.dot_dimension_numbers<[1], [0], [0], [1], [0, 0, 1, 1], [], []>} : vector<64x64xbf16>, vector<64x128xbf16>, vector<64x128xf32> -> vector<64x128xf32>
    %c0_141 = arith.constant 0 : index
    %c0_142 = arith.constant 0 : index
    %134 = vector.load %arg10[%c0_141, %c0_142] : memref<1x128xf32, #tpu.memory_space<vmem>>, vector<1x128xf32>
    %135 = vector.broadcast %134 : vector<1x128xf32> to vector<64x128xf32>
    %136 = arith.addf %133, %135 : vector<64x128xf32>
    %cst_143 = arith.constant 0.000000e+00 : f32
    %137 = vector.broadcast %cst_143 : f32 to vector<64x128xf32>
    %138 = arith.maximumf %136, %137 : vector<64x128xf32>
    %c0_144 = arith.constant 0 : index
    %c0_145 = arith.constant 0 : index
    %c0_146 = arith.constant 0 : index
    %139 = vector.load %arg11[%c0_144, %c0_145, %c0_146] : memref<1x64x128xf32, #tpu.memory_space<vmem>>, vector<1x64x128xf32>
    %140 = vector.shape_cast %139 : vector<1x64x128xf32> to vector<64x128xf32>
    %141 = vector.shape_cast %138 : vector<64x128xf32> to vector<1x64x128xf32>
    tpu.vector_store %arg11[%c0_144, %c0_145, %c0_146], %141 {strides = array<i32>} : memref<1x64x128xf32, #tpu.memory_space<vmem>>, vector<1x64x128xf32>,
    return
  }
  func.func @transform_0(%arg0: i32) -> (i32, i32, i32, i32) {
    %c0_i32 = arith.constant 0 : i32
    %c0_i32_0 = arith.constant 0 : i32
    %c0_i32_1 = arith.constant 0 : i32
    %c0_i32_2 = arith.constant 0 : i32
    return %arg0, %c0_i32, %c0_i32_0, %c0_i32_1 : i32, i32, i32, i32
  }
  func.func @transform_1(%arg0: i32) -> (i32, i32, i32, i32) {
    %c0_i32 = arith.constant 0 : i32
    %c0_i32_0 = arith.constant 0 : i32
    %c0_i32_1 = arith.constant 0 : i32
    %c0_i32_2 = arith.constant 0 : i32
    return %arg0, %c0_i32, %c0_i32_0, %c0_i32_1 : i32, i32, i32, i32
  }
  func.func @transform_2(%arg0: i32) -> (i32, i32, i32, i32) {
    %c0_i32 = arith.constant 0 : i32
    %c0_i32_0 = arith.constant 0 : i32
    %c0_i32_1 = arith.constant 0 : i32
    %c0_i32_2 = arith.constant 0 : i32
    return %arg0, %c0_i32, %c0_i32_0, %c0_i32_1 : i32, i32, i32, i32
  }
  func.func @transform_3(%arg0: i32) -> (i32, i32, i32, i32) {
    %c0_i32 = arith.constant 0 : i32
    %c0_i32_0 = arith.constant 0 : i32
    %c0_i32_1 = arith.constant 0 : i32
    %c0_i32_2 = arith.constant 0 : i32
    return %arg0, %c0_i32, %c0_i32_0, %c0_i32_1 : i32, i32, i32, i32
  }
  func.func @transform_4(%arg0: i32) -> (i32, i32, i32, i32) {
    %c0_i32 = arith.constant 0 : i32
    %c0_i32_0 = arith.constant 0 : i32
    %c0_i32_1 = arith.constant 0 : i32
    %c0_i32_2 = arith.constant 0 : i32
    %c0_i32_3 = arith.constant 0 : i32
    return %c0_i32, %c0_i32_0, %c0_i32_1, %c0_i32_2 : i32, i32, i32, i32
  }
  func.func @transform_5(%arg0: i32) -> (i32, i32) {
    %c0_i32 = arith.constant 0 : i32
    %c0_i32_0 = arith.constant 0 : i32
    %c0_i32_1 = arith.constant 0 : i32
    return %c0_i32, %c0_i32_0 : i32, i32
  }
  func.func @transform_6(%arg0: i32) -> (i32, i32) {
    %c0_i32 = arith.constant 0 : i32
    %c0_i32_0 = arith.constant 0 : i32
    %c0_i32_1 = arith.constant 0 : i32
    return %c0_i32, %c0_i32_0 : i32, i32
  }
  func.func @transform_7(%arg0: i32) -> (i32, i32, i32, i32) {
    %c0_i32 = arith.constant 0 : i32
    %c0_i32_0 = arith.constant 0 : i32
    %c0_i32_1 = arith.constant 0 : i32
    %c0_i32_2 = arith.constant 0 : i32
    %c0_i32_3 = arith.constant 0 : i32
    return %c0_i32, %c0_i32_0, %c0_i32_1, %c0_i32_2 : i32, i32, i32, i32
  }
  func.func @transform_8(%arg0: i32) -> (i32, i32) {
    %c0_i32 = arith.constant 0 : i32
    %c0_i32_0 = arith.constant 0 : i32
    %c0_i32_1 = arith.constant 0 : i32
    return %c0_i32, %c0_i32_0 : i32, i32
  }
  func.func @transform_9(%arg0: i32) -> (i32, i32) {
    %c0_i32 = arith.constant 0 : i32
    %c0_i32_0 = arith.constant 0 : i32
    %c0_i32_1 = arith.constant 0 : i32
    return %c0_i32, %c0_i32_0 : i32, i32
  }
  func.func @transform_10(%arg0: i32) -> (i32, i32, i32) {
    %c0_i32 = arith.constant 0 : i32
    %c0_i32_0 = arith.constant 0 : i32
    %c0_i32_1 = arith.constant 0 : i32
    return %arg0, %c0_i32, %c0_i32_0 : i32, i32, i32
  }
}

</mosaic_0001>

<llo_original>
// kernel: sepconv_forward.1
$region0: #{sepconv_forward.1}
  #allocation0 [shape = 'u32[]', space=smem, size = 0x4, offset = 0x4, fixed_abs, tag = 'smem constant byte address 0x4 - core index']
  #allocation1 [shape = 'u32[144,128]{1,0:T(1,128)}', space=vmem, size = 0x12000, scoped, tag = 'internal scratch']
  #allocation2 [shape = 'f32[10,10,64]{2,1,0:T(8,128)}', space=vmem, size = 0x14000, scoped, tag = 'scratch operand']
  %s0 = inlined_call_operand.vmem [shape: f32[2,9,9,64], index: 0, kind: input, shape index: {}]
  %s1 = inlined_call_operand.vmem [shape: f32[2,9,9,64], index: 1, kind: input, shape index: {}]
  %s2 = inlined_call_operand.vmem [shape: f32[2,9,9,64], index: 2, kind: input, shape index: {}]
  %s3 = inlined_call_operand.vmem [shape: f32[2,9,9,64], index: 3, kind: input, shape index: {}]
  %s4 = inlined_call_operand.vmem [shape: f32[9,1,1,64], index: 4, kind: input, shape index: {}]
  %s5 = inlined_call_operand.vmem [shape: f32[64,64], index: 5, kind: input, shape index: {}]
  %s6 = inlined_call_operand.vmem [shape: f32[1,64], index: 6, kind: input, shape index: {}]
  %s7 = inlined_call_operand.vmem [shape: f32[9,1,1,64], index: 7, kind: input, shape index: {}]
  %s8 = inlined_call_operand.vmem [shape: f32[64,128], index: 8, kind: input, shape index: {}]
  %s9 = inlined_call_operand.vmem [shape: f32[1,128], index: 9, kind: input, shape index: {}]
  %s10 = inlined_call_operand.hbm [shape: f32[2,64,128], index: 10, kind: output, shape index: {}]
  %s11 = sld [smem:[#allocation0]]
  $region73: #{sepconv_forward.1} parent=0
    _
  %s13 = ssub.s32 1, %s11
  %s14 = scalar_select 0, %s13, %s11
  $region1: #{sepconv_forward.1} parent=0
    #allocation3 [shape = 'u8[65536]{0}', space=vmem, size = 0x10000, scoped, tag = 'output window, operand 0']
    #allocation4 [shape = 's32[2]{0}', space=sflag, size = 0x8, scoped, tag = 'scoped memory for sepconv_forward.1']
    %15 = vsyncpa [#allocation4], 0
    %s16 = scalar_lea.sflag [#allocation4], 1
    %17 = vsyncpa %s16, 0
    loop: start=0, step=1, limit=4
    $region2: #{sepconv_forward.1} parent=1 // loop_pre_header
      _
    $region3: #{sepconv_forward.1} parent=1 // loop_header
      %s19 = sphi 0, %s23
      %p20 = scmp.ge.s32.totalorder %s19, 4
      %s29 = sphi 0, %s31
      %s32 = sphi 0, %s29
      %s33 = sphi 0, %s32
      %s49 = sphi 0, %s33
      %s55 = sphi 0, %s57
      %s58 = sphi 0, %s55
      %s59 = sphi 0, %s58
      %s75 = sphi 0, %s59
      %s81 = sphi 0, %s83
      %s84 = sphi 0, %s81
      %s85 = sphi 0, %s84
      %s101 = sphi 0, %s85
      %s107 = sphi 0, %s109
      %s110 = sphi 0, %s107
      %s111 = sphi 0, %s110
      %s127 = sphi 0, %s111
      %s131 = sphi 0, %s131
      %s133 = sphi 0, %s131
      %s134 = sphi 0, %s133
      %s148 = sphi 0, %s134
      %s152 = sphi 0, %s152
      %s154 = sphi 0, %s152
      %s155 = sphi 0, %s154
      %s169 = sphi 0, %s155
      %s173 = sphi 0, %s173
      %s175 = sphi 0, %s173
      %s176 = sphi 0, %s175
      %s190 = sphi 0, %s176
      %s194 = sphi 0, %s194
      %s196 = sphi 0, %s194
      %s197 = sphi 0, %s196
      %s211 = sphi 0, %s197
      %s215 = sphi 0, %s215
      %s217 = sphi 0, %s215
      %s218 = sphi 0, %s217
      %s232 = sphi 0, %s218
      %s236 = sphi 0, %s236
      %s238 = sphi 0, %s236
      %s239 = sphi 0, %s238
      %s253 = sphi 0, %s239
      %s259 = sphi 0, %s261
      %s262 = sphi 0, %s259
      %s263 = sphi 0, %s262
      %s279 = sphi 0, %s263
    $region4: #{sepconv_forward.1} parent=1 // loop_header_branch
      %22 = sbr.rel (%p20) target = $region8
    $region5: #{sepconv_forward.1} parent=1 // loop_body
      %s24 = ssub.s32 %s19, 1
      %s25 = ssub.s32 %s19, 2
      %s26 = sadd.s32 %s19, 1
      %s27 = ssub.s32 %s19, %s26
      %p28 = scmp.eq.s32.totalorder %s27, 0
      %s30 = sadd.s32 %s29, 1
      %s31 = scalar_select %p28, %s29, %s30
      %p34 = pneg %p28
      %p35 = scmp.eq.s32.totalorder %s19, 1
      %p36 = por %p34, %p35
      %p37 = scmp.ne.s32.totalorder %s29, %s32
      %p38 = scmp.eq.s32.totalorder %s19, 0
      %p39 = por %p37, %p38
      %p40 = scmp.ne.s32.totalorder %s29, %s32
      %p41 = scmp.eq.s32.totalorder %s24, 1
      %p42 = por %p40, %p41
      %p43 = scmp.ne.s32.totalorder %s32, %s33
      %p44 = scmp.eq.s32.totalorder %s24, 0
      %p45 = por %p43, %p44
      %p46 = scmp.ne.s32.totalorder %s32, %s33
      %p47 = scmp.eq.s32.totalorder %s25, 1
      %p48 = por %p46, %p47
      %p50 = scmp.ne.s32.totalorder %s33, %s49
      %p51 = scmp.eq.s32.totalorder %s25, 0
      %p52 = por %p50, %p51
      %s53 = ssub.s32 %s19, %s26
      %p54 = scmp.eq.s32.totalorder %s53, 0
      %s56 = sadd.s32 %s55, 1
      %s57 = scalar_select %p54, %s55, %s56
      %p60 = pneg %p54
      %p61 = scmp.eq.s32.totalorder %s19, 1
      %p62 = por %p60, %p61
      %p63 = scmp.ne.s32.totalorder %s55, %s58
      %p64 = scmp.eq.s32.totalorder %s19, 0
      %p65 = por %p63, %p64
      %p66 = scmp.ne.s32.totalorder %s55, %s58
      %p67 = scmp.eq.s32.totalorder %s24, 1
      %p68 = por %p66, %p67
      %p69 = scmp.ne.s32.totalorder %s58, %s59
      %p70 = scmp.eq.s32.totalorder %s24, 0
      %p71 = por %p69, %p70
      %p72 = scmp.ne.s32.totalorder %s58, %s59
      %p73 = scmp.eq.s32.totalorder %s25, 1
      %p74 = por %p72, %p73
      %p76 = scmp.ne.s32.totalorder %s59, %s75
      %p77 = scmp.eq.s32.totalorder %s25, 0
      %p78 = por %p76, %p77
      %s79 = ssub.s32 %s19, %s26
      %p80 = scmp.eq.s32.totalorder %s79, 0
      %s82 = sadd.s32 %s81, 1
      %s83 = scalar_select %p80, %s81, %s82
      %p86 = pneg %p80
      %p87 = scmp.eq.s32.totalorder %s19, 1
      %p88 = por %p86, %p87
      %p89 = scmp.ne.s32.totalorder %s81, %s84
      %p90 = scmp.eq.s32.totalorder %s19, 0
      %p91 = por %p89, %p90
      %p92 = scmp.ne.s32.totalorder %s81, %s84
      %p93 = scmp.eq.s32.totalorder %s24, 1
      %p94 = por %p92, %p93
      %p95 = scmp.ne.s32.totalorder %s84, %s85
      %p96 = scmp.eq.s32.totalorder %s24, 0
      %p97 = por %p95, %p96
      %p98 = scmp.ne.s32.totalorder %s84, %s85
      %p99 = scmp.eq.s32.totalorder %s25, 1
      %p100 = por %p98, %p99
      %p102 = scmp.ne.s32.totalorder %s85, %s101
      %p103 = scmp.eq.s32.totalorder %s25, 0
      %p104 = por %p102, %p103
      %s105 = ssub.s32 %s19, %s26
      %p106 = scmp.eq.s32.totalorder %s105, 0
      %s108 = sadd.s32 %s107, 1
      %s109 = scalar_select %p106, %s107, %s108
      %p112 = pneg %p106
      %p113 = scmp.eq.s32.totalorder %s19, 1
      %p114 = por %p112, %p113
      %p115 = scmp.ne.s32.totalorder %s107, %s110
      %p116 = scmp.eq.s32.totalorder %s19, 0
      %p117 = por %p115, %p116
      %p118 = scmp.ne.s32.totalorder %s107, %s110
      %p119 = scmp.eq.s32.totalorder %s24, 1
      %p120 = por %p118, %p119
      %p121 = scmp.ne.s32.totalorder %s110, %s111
      %p122 = scmp.eq.s32.totalorder %s24, 0
      %p123 = por %p121, %p122
      %p124 = scmp.ne.s32.totalorder %s110, %s111
      %p125 = scmp.eq.s32.totalorder %s25, 1
      %p126 = por %p124, %p125
      %p128 = scmp.ne.s32.totalorder %s111, %s127
      %p129 = scmp.eq.s32.totalorder %s25, 0
      %p130 = por %p128, %p129
      %s132 = sadd.s32 %s131, 1
      %p135 = scmp.eq.s32.totalorder %s19, 1
      %p136 = scmp.ne.s32.totalorder %s131, %s133
      %p137 = scmp.eq.s32.totalorder %s19, 0
      %p138 = por %p136, %p137
      %p139 = scmp.ne.s32.totalorder %s131, %s133
      %p140 = scmp.eq.s32.totalorder %s24, 1
      %p141 = por %p139, %p140
      %p142 = scmp.ne.s32.totalorder %s133, %s134
      %p143 = scmp.eq.s32.totalorder %s24, 0
      %p144 = por %p142, %p143
      %p145 = scmp.ne.s32.totalorder %s133, %s134
      %p146 = scmp.eq.s32.totalorder %s25, 1
      %p147 = por %p145, %p146
      %p149 = scmp.ne.s32.totalorder %s134, %s148
      %p150 = scmp.eq.s32.totalorder %s25, 0
      %p151 = por %p149, %p150
      %s153 = sadd.s32 %s152, 1
      %p156 = scmp.eq.s32.totalorder %s19, 1
      %p157 = scmp.ne.s32.totalorder %s152, %s154
      %p158 = scmp.eq.s32.totalorder %s19, 0
      %p159 = por %p157, %p158
      %p160 = scmp.ne.s32.totalorder %s152, %s154
      %p161 = scmp.eq.s32.totalorder %s24, 1
      %p162 = por %p160, %p161
      %p163 = scmp.ne.s32.totalorder %s154, %s155
      %p164 = scmp.eq.s32.totalorder %s24, 0
      %p165 = por %p163, %p164
      %p166 = scmp.ne.s32.totalorder %s154, %s155
      %p167 = scmp.eq.s32.totalorder %s25, 1
      %p168 = por %p166, %p167
      %p170 = scmp.ne.s32.totalorder %s155, %s169
      %p171 = scmp.eq.s32.totalorder %s25, 0
      %p172 = por %p170, %p171
      %s174 = sadd.s32 %s173, 1
      %p177 = scmp.eq.s32.totalorder %s19, 1
      %p178 = scmp.ne.s32.totalorder %s173, %s175
      %p179 = scmp.eq.s32.totalorder %s19, 0
      %p180 = por %p178, %p179
      %p181 = scmp.ne.s32.totalorder %s173, %s175
      %p182 = scmp.eq.s32.totalorder %s24, 1
      %p183 = por %p181, %p182
      %p184 = scmp.ne.s32.totalorder %s175, %s176
      %p185 = scmp.eq.s32.totalorder %s24, 0
      %p186 = por %p184, %p185
      %p187 = scmp.ne.s32.totalorder %s175, %s176
      %p188 = scmp.eq.s32.totalorder %s25, 1
      %p189 = por %p187, %p188
      %p191 = scmp.ne.s32.totalorder %s176, %s190
      %p192 = scmp.eq.s32.totalorder %s25, 0
      %p193 = por %p191, %p192
      %s195 = sadd.s32 %s194, 1
      %p198 = scmp.eq.s32.totalorder %s19, 1
      %p199 = scmp.ne.s32.totalorder %s194, %s196
      %p200 = scmp.eq.s32.totalorder %s19, 0
      %p201 = por %p199, %p200
      %p202 = scmp.ne.s32.totalorder %s194, %s196
      %p203 = scmp.eq.s32.totalorder %s24, 1
      %p204 = por %p202, %p203
      %p205 = scmp.ne.s32.totalorder %s196, %s197
      %p206 = scmp.eq.s32.totalorder %s24, 0
      %p207 = por %p205, %p206
      %p208 = scmp.ne.s32.totalorder %s196, %s197
      %p209 = scmp.eq.s32.totalorder %s25, 1
      %p210 = por %p208, %p209
      %p212 = scmp.ne.s32.totalorder %s197, %s211
      %p213 = scmp.eq.s32.totalorder %s25, 0
      %p214 = por %p212, %p213
      %s216 = sadd.s32 %s215, 1
      %p219 = scmp.eq.s32.totalorder %s19, 1
      %p220 = scmp.ne.s32.totalorder %s215, %s217
      %p221 = scmp.eq.s32.totalorder %s19, 0
      %p222 = por %p220, %p221
      %p223 = scmp.ne.s32.totalorder %s215, %s217
      %p224 = scmp.eq.s32.totalorder %s24, 1
      %p225 = por %p223, %p224
      %p226 = scmp.ne.s32.totalorder %s217, %s218
      %p227 = scmp.eq.s32.totalorder %s24, 0
      %p228 = por %p226, %p227
      %p229 = scmp.ne.s32.totalorder %s217, %s218
      %p230 = scmp.eq.s32.totalorder %s25, 1
      %p231 = por %p229, %p230
      %p233 = scmp.ne.s32.totalorder %s218, %s232
      %p234 = scmp.eq.s32.totalorder %s25, 0
      %p235 = por %p233, %p234
      %s237 = sadd.s32 %s236, 1
      %p240 = scmp.eq.s32.totalorder %s19, 1
      %p241 = scmp.ne.s32.totalorder %s236, %s238
      %p242 = scmp.eq.s32.totalorder %s19, 0
      %p243 = por %p241, %p242
      %p244 = scmp.ne.s32.totalorder %s236, %s238
      %p245 = scmp.eq.s32.totalorder %s24, 1
      %p246 = por %p244, %p245
      %p247 = scmp.ne.s32.totalorder %s238, %s239
      %p248 = scmp.eq.s32.totalorder %s24, 0
      %p249 = por %p247, %p248
      %p250 = scmp.ne.s32.totalorder %s238, %s239
      %p251 = scmp.eq.s32.totalorder %s25, 1
      %p252 = por %p250, %p251
      %p254 = scmp.ne.s32.totalorder %s239, %s253
      %p255 = scmp.eq.s32.totalorder %s25, 0
      %p256 = por %p254, %p255
      %s257 = ssub.s32 %s19, %s26
      %p258 = scmp.eq.s32.totalorder %s257, 0
      %s260 = sadd.s32 %s259, 1
      %s261 = scalar_select %p258, %s259, %s260
      %p264 = pneg %p258
      %p265 = scmp.eq.s32.totalorder %s19, 1
      %p266 = por %p264, %p265
      %p267 = scmp.ne.s32.totalorder %s259, %s262
      %p268 = scmp.eq.s32.totalorder %s19, 0
      %p269 = por %p267, %p268
      %p270 = scmp.ne.s32.totalorder %s259, %s262
      %p271 = scmp.eq.s32.totalorder %s24, 1
      %p272 = por %p270, %p271
      %p273 = scmp.ne.s32.totalorder %s262, %s263
      %p274 = scmp.eq.s32.totalorder %s24, 0
      %p275 = por %p273, %p274
      %p276 = scmp.ne.s32.totalorder %s262, %s263
      %p277 = scmp.eq.s32.totalorder %s25, 1
      %p278 = por %p276, %p277
      %p280 = scmp.ne.s32.totalorder %s263, %s279
      %p281 = scmp.eq.s32.totalorder %s25, 0
      %p282 = por %p280, %p281
      %p283 = scmp.le.s32.totalorder 1, %s19
      %p284 = scmp.lt.s32.totalorder %s19, 3
      %p285 = pnand %p283, %p284
      %p286 = pneg %p285
      // Predicated region
      $region9: #{sepconv_forward.1} parent=5 // pred_check
        _
      $region10: #{sepconv_forward.1} parent=5 // pred_check_branch
        %288 = sbr.rel (%p285) target = $region12
      $region11: #{sepconv_forward.1} parent=5 // pred_region
        %s289 = ssub.s32 %s19, 1
        // Predicated region
        $region13: #{sepconv_forward.1} parent=11 // pred_check
          %p290 = pneg %p144
        $region14: #{sepconv_forward.1} parent=11 // pred_check_branch
          %292 = sbr.rel (%p290) target = $region16
        $region15: #{sepconv_forward.1} parent=11 // pred_region
          _
        $region16: #{sepconv_forward.1} parent=11 // pred_fallthru
          _
        // Predicated region
        $region17: #{sepconv_forward.1} parent=11 // pred_check
          %p293 = pneg %p165
        $region18: #{sepconv_forward.1} parent=11 // pred_check_branch
          %295 = sbr.rel (%p293) target = $region20
        $region19: #{sepconv_forward.1} parent=11 // pred_region
          _
        $region20: #{sepconv_forward.1} parent=11 // pred_fallthru
          _
        // Predicated region
        $region21: #{sepconv_forward.1} parent=11 // pred_check
          %p296 = pneg %p186
        $region22: #{sepconv_forward.1} parent=11 // pred_check_branch
          %298 = sbr.rel (%p296) target = $region24
        $region23: #{sepconv_forward.1} parent=11 // pred_region
          _
        $region24: #{sepconv_forward.1} parent=11 // pred_fallthru
          _
        // Predicated region
        $region25: #{sepconv_forward.1} parent=11 // pred_check
          %p299 = pneg %p207
        $region26: #{sepconv_forward.1} parent=11 // pred_check_branch
          %301 = sbr.rel (%p299) target = $region28
        $region27: #{sepconv_forward.1} parent=11 // pred_region
          _
        $region28: #{sepconv_forward.1} parent=11 // pred_fallthru
          _
        // Predicated region
        $region29: #{sepconv_forward.1} parent=11 // pred_check
          %p302 = pneg %p228
        $region30: #{sepconv_forward.1} parent=11 // pred_check_branch
          %304 = sbr.rel (%p302) target = $region32
        $region31: #{sepconv_forward.1} parent=11 // pred_region
          _
        $region32: #{sepconv_forward.1} parent=11 // pred_fallthru
          _
        // Predicated region
        $region33: #{sepconv_forward.1} parent=11 // pred_check
          %p305 = pneg %p249
        $region34: #{sepconv_forward.1} parent=11 // pred_check_branch
          %307 = sbr.rel (%p305) target = $region36
        $region35: #{sepconv_forward.1} parent=11 // pred_region
          _
        $region36: #{sepconv_forward.1} parent=11 // pred_fallthru
          _
      $region12: #{sepconv_forward.1} parent=5 // pred_fallthru
        _
      %p308 = scmp.lt.s32.totalorder %s19, 2
      // Predicated region
      $region37: #{sepconv_forward.1} parent=5 // pred_check
        %p309 = pneg %p308
      $region38: #{sepconv_forward.1} parent=5 // pred_check_branch
        %311 = sbr.rel (%p309) target = $region40
      $region39: #{sepconv_forward.1} parent=5 // pred_region
        // Predicated region
        $region41: #{sepconv_forward.1} parent=39 // pred_check
          %p312 = pneg %p39
        $region42: #{sepconv_forward.1} parent=39 // pred_check_branch
          %314 = sbr.rel (%p312) target = $region44
        $region43: #{sepconv_forward.1} parent=39 // pred_region
          %p315 = scmp.lt.s32.totalorder %s19, 1
          %s316 = scalar_select %p315, %s19, 1
          %s317 = smul.addr %s316, 18
          %s318 = smul.addr %s317, 8
          %s319 = scalar_lea.vmem %s0, %s318
        $region44: #{sepconv_forward.1} parent=39 // pred_fallthru
          _
        // Predicated region
        $region45: #{sepconv_forward.1} parent=39 // pred_check
          %p320 = pneg %p65
        $region46: #{sepconv_forward.1} parent=39 // pred_check_branch
          %322 = sbr.rel (%p320) target = $region48
        $region47: #{sepconv_forward.1} parent=39 // pred_region
          %p323 = scmp.lt.s32.totalorder %s19, 1
          %s324 = scalar_select %p323, %s19, 1
          %s325 = smul.addr %s324, 18
          %s326 = smul.addr %s325, 8
          %s327 = scalar_lea.vmem %s1, %s326
        $region48: #{sepconv_forward.1} parent=39 // pred_fallthru
          _
        // Predicated region
        $region49: #{sepconv_forward.1} parent=39 // pred_check
          %p328 = pneg %p91
        $region50: #{sepconv_forward.1} parent=39 // pred_check_branch
          %330 = sbr.rel (%p328) target = $region52
        $region51: #{sepconv_forward.1} parent=39 // pred_region
          %p331 = scmp.lt.s32.totalorder %s19, 1
          %s332 = scalar_select %p331, %s19, 1
          %s333 = smul.addr %s332, 18
          %s334 = smul.addr %s333, 8
          %s335 = scalar_lea.vmem %s2, %s334
        $region52: #{sepconv_forward.1} parent=39 // pred_fallthru
          _
        // Predicated region
        $region53: #{sepconv_forward.1} parent=39 // pred_check
          %p336 = pneg %p117
        $region54: #{sepconv_forward.1} parent=39 // pred_check_branch
          %338 = sbr.rel (%p336) target = $region56
        $region55: #{sepconv_forward.1} parent=39 // pred_region
          %p339 = scmp.lt.s32.totalorder %s19, 1
          %s340 = scalar_select %p339, %s19, 1
          %s341 = smul.addr %s340, 18
          %s342 = smul.addr %s341, 8
          %s343 = scalar_lea.vmem %s3, %s342
        $region56: #{sepconv_forward.1} parent=39 // pred_fallthru
          _
      $region40: #{sepconv_forward.1} parent=5 // pred_fallthru
        _
      %p344 = scmp.le.s32.totalorder 1, %s19
      %p345 = scmp.lt.s32.totalorder %s19, 3
      %p346 = pnand %p344, %p345
      %p347 = pneg %p346
      // Predicated region
      $region57: #{sepconv_forward.1} parent=5 // pred_check
        _
      $region58: #{sepconv_forward.1} parent=5 // pred_check_branch
        %349 = sbr.rel (%p346) target = $region60
      $region59: #{sepconv_forward.1} parent=5 // pred_region
        %s350 = ssub.s32 %s19, 1
        %p351 = scmp.lt.s32.totalorder %s24, 1
        %s352 = scalar_select %p351, %s24, 1
        %s353 = smul.addr %s352, 18
        %s354 = smul.addr %s353, 8
        %s355 = scalar_lea.vmem %s0, %s354
        %p356 = pneg %p45
        %p357 = pneg %p42
        %p358 = scmp.lt.s32.totalorder %s24, 1
        %s359 = scalar_select %p358, %s24, 1
        %s360 = smul.addr %s359, 18
        %s361 = smul.addr %s360, 8
        %s362 = scalar_lea.vmem %s1, %s361
        %p363 = pneg %p71
        %p364 = pneg %p68
        %p365 = scmp.lt.s32.totalorder %s24, 1
        %s366 = scalar_select %p365, %s24, 1
        %s367 = smul.addr %s366, 18
        %s368 = smul.addr %s367, 8
        %s369 = scalar_lea.vmem %s2, %s368
        %p370 = pneg %p97
        %p371 = pneg %p94
        %p372 = scmp.lt.s32.totalorder %s24, 1
        %s373 = scalar_select %p372, %s24, 1
        %s374 = smul.addr %s373, 18
        %s375 = smul.addr %s374, 8
        %s376 = scalar_lea.vmem %s3, %s375
        %p377 = pneg %p123
        %p378 = pneg %p120
        %p379 = pneg %p144
        %p380 = pneg %p141
        %p381 = pneg %p165
        %p382 = pneg %p162
        %p383 = pneg %p186
        %p384 = pneg %p183
        %p385 = pneg %p207
        %p386 = pneg %p204
        %p387 = pneg %p228
        %p388 = pneg %p225
        %p389 = pneg %p249
        %p390 = pneg %p246
        %p391 = pneg %p275
        %p392 = pneg %p272
        %s393 = sand.u32 %s262, 1
        %s394 = scalar_lea.sflag [#allocation4], %s393
        %s395 = sand.u32 %s262, 1
        %s396 = smul.addr %s395, 64
        %s397 = scalar_lea.vmem [#allocation3], %s396
        %p398 = scmp.lt.s32.totalorder %s24, 1
        %s399 = scalar_select %p398, %s24, 1
        %s400 = smul.addr %s399, 18
        %s401 = smul.addr %s400, 8
        %s402 = scalar_lea.vmem %s0, %s401
        %p403 = scmp.lt.s32.totalorder %s24, 1
        %s404 = scalar_select %p403, %s24, 1
        %s405 = smul.addr %s404, 18
        %s406 = smul.addr %s405, 8
        %s407 = scalar_lea.vmem %s1, %s406
        %p408 = scmp.lt.s32.totalorder %s24, 1
        %s409 = scalar_select %p408, %s24, 1
        %s410 = smul.addr %s409, 18
        %s411 = smul.addr %s410, 8
        %s412 = scalar_lea.vmem %s2, %s411
        %p413 = scmp.lt.s32.totalorder %s24, 1
        %s414 = scalar_select %p413, %s24, 1
        %s415 = smul.addr %s414, 18
        %s416 = smul.addr %s415, 8
        %s417 = scalar_lea.vmem %s3, %s416
        %v419 = vld [vmem:[%s402] sm:$0xff]
        %v420 = vld [vmem:[%s402 + $0x10] sm:$0xff]
        %v421 = vld [vmem:[%s402 + $0x20] sm:$0xff]
        %v422 = vld [vmem:[%s402 + $0x30] sm:$0xff]
        %v423 = vld [vmem:[%s402 + $0x40] sm:$0xff]
        %v424 = vld [vmem:[%s402 + $0x50] sm:$0xff]
        %v425 = vld [vmem:[%s402 + $0x60] sm:$0xff]
        %v426 = vld [vmem:[%s402 + $0x70] sm:$0xff]
        %v427 = vld [vmem:[%s4] sm:$0x1]
        %v429 = vlaneseq
        %v430 = vshrl.u32 %v429, 7
        %v431 = vsub.s32 0, %v430
        %v432 = vrot.slane %v427, %v431
        %v434 = vmul.f32 %v419, %v432
        %v435 = vmul.f32 %v420, %v432
        %v436 = vmul.f32 %v421, %v432
        %v437 = vmul.f32 %v422, %v432
        %v438 = vmul.f32 %v423, %v432
        %v439 = vmul.f32 %v424, %v432
        %v440 = vmul.f32 %v425, %v432
        %v441 = vmul.f32 %v426, %v432
        %v442 = vld [vmem:[%s407] sm:$0xff]
        %v443 = vld [vmem:[%s407 + $0x10] sm:$0xff]
        %v444 = vld [vmem:[%s407 + $0x20] sm:$0xff]
        %v445 = vld [vmem:[%s407 + $0x30] sm:$0xff]
        %v446 = vld [vmem:[%s407 + $0x40] sm:$0xff]
        %v447 = vld [vmem:[%s407 + $0x50] sm:$0xff]
        %v448 = vld [vmem:[%s407 + $0x60] sm:$0xff]
        %v449 = vld [vmem:[%s407 + $0x70] sm:$0xff]
        %s450 = scalar_lea.vmem %s4, 1
        %v451 = vld [vmem:[%s450] sm:$0x1]
        %v453 = vlaneseq
        %v454 = vshrl.u32 %v453, 7
        %v455 = vsub.s32 0, %v454
        %v456 = vrot.slane %v451, %v455
        %v458 = vmul.f32 %v442, %v456
        %v459 = vmul.f32 %v443, %v456
        %v460 = vmul.f32 %v444, %v456
        %v461 = vmul.f32 %v445, %v456
        %v462 = vmul.f32 %v446, %v456
        %v463 = vmul.f32 %v447, %v456
        %v464 = vmul.f32 %v448, %v456
        %v465 = vmul.f32 %v449, %v456
        %v466 = vadd.f32 %v434, %v458
        %v467 = vadd.f32 %v435, %v459
        %v468 = vadd.f32 %v436, %v460
        %v469 = vadd.f32 %v437, %v461
        %v470 = vadd.f32 %v438, %v462
        %v471 = vadd.f32 %v439, %v463
        %v472 = vadd.f32 %v440, %v464
        %v473 = vadd.f32 %v441, %v465
        %v474 = vld [vmem:[%s402 + $0x1] sm:$0xff]
        %v475 = vld [vmem:[%s402 + $0x11] sm:$0xff]
        %v476 = vld [vmem:[%s402 + $0x21] sm:$0xff]
        %v477 = vld [vmem:[%s402 + $0x31] sm:$0xff]
        %v478 = vld [vmem:[%s402 + $0x41] sm:$0xff]
        %v479 = vld [vmem:[%s402 + $0x51] sm:$0xff]
        %v480 = vld [vmem:[%s402 + $0x61] sm:$0xff]
        %v481 = vld [vmem:[%s402 + $0x71] sm:$0xff]
        %s482 = scalar_lea.vmem %s4, 2
        %v483 = vld [vmem:[%s482] sm:$0x1]
        %v485 = vlaneseq
        %v486 = vshrl.u32 %v485, 7
        %v487 = vsub.s32 0, %v486
        %v488 = vrot.slane %v483, %v487
        %v490 = vmul.f32 %v474, %v488
        %v491 = vmul.f32 %v475, %v488
        %v492 = vmul.f32 %v476, %v488
        %v493 = vmul.f32 %v477, %v488
        %v494 = vmul.f32 %v478, %v488
        %v495 = vmul.f32 %v479, %v488
        %v496 = vmul.f32 %v480, %v488
        %v497 = vmul.f32 %v481, %v488
        %v498 = vadd.f32 %v466, %v490
        %v499 = vadd.f32 %v467, %v491
        %v500 = vadd.f32 %v468, %v492
        %v501 = vadd.f32 %v469, %v493
        %v502 = vadd.f32 %v470, %v494
        %v503 = vadd.f32 %v471, %v495
        %v504 = vadd.f32 %v472, %v496
        %v505 = vadd.f32 %v473, %v497
        %v506 = vld [vmem:[%s412] sm:$0xff]
        %v507 = vld [vmem:[%s412 + $0x10] sm:$0xff]
        %v508 = vld [vmem:[%s412 + $0x20] sm:$0xff]
        %v509 = vld [vmem:[%s412 + $0x30] sm:$0xff]
        %v510 = vld [vmem:[%s412 + $0x40] sm:$0xff]
        %v511 = vld [vmem:[%s412 + $0x50] sm:$0xff]
        %v512 = vld [vmem:[%s412 + $0x60] sm:$0xff]
        %v513 = vld [vmem:[%s412 + $0x70] sm:$0xff]
        %s514 = scalar_lea.vmem %s4, 3
        %v515 = vld [vmem:[%s514] sm:$0x1]
        %v517 = vlaneseq
        %v518 = vshrl.u32 %v517, 7
        %v519 = vsub.s32 0, %v518
        %v520 = vrot.slane %v515, %v519
        %v522 = vmul.f32 %v506, %v520
        %v523 = vmul.f32 %v507, %v520
        %v524 = vmul.f32 %v508, %v520
        %v525 = vmul.f32 %v509, %v520
        %v526 = vmul.f32 %v510, %v520
        %v527 = vmul.f32 %v511, %v520
        %v528 = vmul.f32 %v512, %v520
        %v529 = vmul.f32 %v513, %v520
        %v530 = vadd.f32 %v498, %v522
        %v531 = vadd.f32 %v499, %v523
        %v532 = vadd.f32 %v500, %v524
        %v533 = vadd.f32 %v501, %v525
        %v534 = vadd.f32 %v502, %v526
        %v535 = vadd.f32 %v503, %v527
        %v536 = vadd.f32 %v504, %v528
        %v537 = vadd.f32 %v505, %v529
        %v538 = vld [vmem:[%s417] sm:$0xff]
        %v539 = vld [vmem:[%s417 + $0x10] sm:$0xff]
        %v540 = vld [vmem:[%s417 + $0x20] sm:$0xff]
        %v541 = vld [vmem:[%s417 + $0x30] sm:$0xff]
        %v542 = vld [vmem:[%s417 + $0x40] sm:$0xff]
        %v543 = vld [vmem:[%s417 + $0x50] sm:$0xff]
        %v544 = vld [vmem:[%s417 + $0x60] sm:$0xff]
        %v545 = vld [vmem:[%s417 + $0x70] sm:$0xff]
        %s546 = scalar_lea.vmem %s4, 4
        %v547 = vld [vmem:[%s546] sm:$0x1]
        %v549 = vlaneseq
        %v550 = vshrl.u32 %v549, 7
        %v551 = vsub.s32 0, %v550
        %v552 = vrot.slane %v547, %v551
        %v554 = vmul.f32 %v538, %v552
        %v555 = vmul.f32 %v539, %v552
        %v556 = vmul.f32 %v540, %v552
        %v557 = vmul.f32 %v541, %v552
        %v558 = vmul.f32 %v542, %v552
        %v559 = vmul.f32 %v543, %v552
        %v560 = vmul.f32 %v544, %v552
        %v561 = vmul.f32 %v545, %v552
        %v562 = vadd.f32 %v530, %v554
        %v563 = vadd.f32 %v531, %v555
        %v564 = vadd.f32 %v532, %v556
        %v565 = vadd.f32 %v533, %v557
        %v566 = vadd.f32 %v534, %v558
        %v567 = vadd.f32 %v535, %v559
        %v568 = vadd.f32 %v536, %v560
        %v569 = vadd.f32 %v537, %v561
        %v570 = vld [vmem:[%s412 + $0x1] sm:$0xff]
        %v571 = vld [vmem:[%s412 + $0x11] sm:$0xff]
        %v572 = vld [vmem:[%s412 + $0x21] sm:$0xff]
        %v573 = vld [vmem:[%s412 + $0x31] sm:$0xff]
        %v574 = vld [vmem:[%s412 + $0x41] sm:$0xff]
        %v575 = vld [vmem:[%s412 + $0x51] sm:$0xff]
        %v576 = vld [vmem:[%s412 + $0x61] sm:$0xff]
        %v577 = vld [vmem:[%s412 + $0x71] sm:$0xff]
        %s578 = scalar_lea.vmem %s4, 5
        %v579 = vld [vmem:[%s578] sm:$0x1]
        %v581 = vlaneseq
        %v582 = vshrl.u32 %v581, 7
        %v583 = vsub.s32 0, %v582
        %v584 = vrot.slane %v579, %v583
        %v586 = vmul.f32 %v570, %v584
        %v587 = vmul.f32 %v571, %v584
        %v588 = vmul.f32 %v572, %v584
        %v589 = vmul.f32 %v573, %v584
        %v590 = vmul.f32 %v574, %v584
        %v591 = vmul.f32 %v575, %v584
        %v592 = vmul.f32 %v576, %v584
        %v593 = vmul.f32 %v577, %v584
        %v594 = vadd.f32 %v562, %v586
        %v595 = vadd.f32 %v563, %v587
        %v596 = vadd.f32 %v564, %v588
        %v597 = vadd.f32 %v565, %v589
        %v598 = vadd.f32 %v566, %v590
        %v599 = vadd.f32 %v567, %v591
        %v600 = vadd.f32 %v568, %v592
        %v601 = vadd.f32 %v569, %v593
        %s602 = scalar_lea.vmem %s402, 16
        %v603 = vld [vmem:[%s602] sm:$0xff]
        %v604 = vld [vmem:[%s602 + $0x10] sm:$0xff]
        %v605 = vld [vmem:[%s602 + $0x20] sm:$0xff]
        %v606 = vld [vmem:[%s602 + $0x30] sm:$0xff]
        %v607 = vld [vmem:[%s602 + $0x40] sm:$0xff]
        %v608 = vld [vmem:[%s602 + $0x50] sm:$0xff]
        %v609 = vld [vmem:[%s602 + $0x60] sm:$0xff]
        %v610 = vld [vmem:[%s602 + $0x70] sm:$0xff]
        %s611 = scalar_lea.vmem %s4, 6
        %v612 = vld [vmem:[%s611] sm:$0x1]
        %v614 = vlaneseq
        %v615 = vshrl.u32 %v614, 7
        %v616 = vsub.s32 0, %v615
        %v617 = vrot.slane %v612, %v616
        %v619 = vmul.f32 %v603, %v617
        %v620 = vmul.f32 %v604, %v617
        %v621 = vmul.f32 %v605, %v617
        %v622 = vmul.f32 %v606, %v617
        %v623 = vmul.f32 %v607, %v617
        %v624 = vmul.f32 %v608, %v617
        %v625 = vmul.f32 %v609, %v617
        %v626 = vmul.f32 %v610, %v617
        %v627 = vadd.f32 %v594, %v619
        %v628 = vadd.f32 %v595, %v620
        %v629 = vadd.f32 %v596, %v621
        %v630 = vadd.f32 %v597, %v622
        %v631 = vadd.f32 %v598, %v623
        %v632 = vadd.f32 %v599, %v624
        %v633 = vadd.f32 %v600, %v625
        %v634 = vadd.f32 %v601, %v626
        %s635 = scalar_lea.vmem %s407, 16
        %v636 = vld [vmem:[%s635] sm:$0xff]
        %v637 = vld [vmem:[%s635 + $0x10] sm:$0xff]
        %v638 = vld [vmem:[%s635 + $0x20] sm:$0xff]
        %v639 = vld [vmem:[%s635 + $0x30] sm:$0xff]
        %v640 = vld [vmem:[%s635 + $0x40] sm:$0xff]
        %v641 = vld [vmem:[%s635 + $0x50] sm:$0xff]
        %v642 = vld [vmem:[%s635 + $0x60] sm:$0xff]
        %v643 = vld [vmem:[%s635 + $0x70] sm:$0xff]
        %s644 = scalar_lea.vmem %s4, 7
        %v645 = vld [vmem:[%s644] sm:$0x1]
        %v647 = vlaneseq
        %v648 = vshrl.u32 %v647, 7
        %v649 = vsub.s32 0, %v648
        %v650 = vrot.slane %v645, %v649
        %v652 = vmul.f32 %v636, %v650
        %v653 = vmul.f32 %v637, %v650
        %v654 = vmul.f32 %v638, %v650
        %v655 = vmul.f32 %v639, %v650
        %v656 = vmul.f32 %v640, %v650
        %v657 = vmul.f32 %v641, %v650
        %v658 = vmul.f32 %v642, %v650
        %v659 = vmul.f32 %v643, %v650
        %v660 = vadd.f32 %v627, %v652
        %v661 = vadd.f32 %v628, %v653
        %v662 = vadd.f32 %v629, %v654
        %v663 = vadd.f32 %v630, %v655
        %v664 = vadd.f32 %v631, %v656
        %v665 = vadd.f32 %v632, %v657
        %v666 = vadd.f32 %v633, %v658
        %v667 = vadd.f32 %v634, %v659
        %v668 = vld [vmem:[%s602 + $0x1] sm:$0xff]
        %v669 = vld [vmem:[%s602 + $0x11] sm:$0xff]
        %v670 = vld [vmem:[%s602 + $0x21] sm:$0xff]
        %v671 = vld [vmem:[%s602 + $0x31] sm:$0xff]
        %v672 = vld [vmem:[%s602 + $0x41] sm:$0xff]
        %v673 = vld [vmem:[%s602 + $0x51] sm:$0xff]
        %v674 = vld [vmem:[%s602 + $0x61] sm:$0xff]
        %v675 = vld [vmem:[%s602 + $0x71] sm:$0xff]
        %s676 = scalar_lea.vmem %s4, 8
        %v677 = vld [vmem:[%s676] sm:$0x1]
        %v679 = vlaneseq
        %v680 = vshrl.u32 %v679, 7
        %v681 = vsub.s32 0, %v680
        %v682 = vrot.slane %v677, %v681
        %v684 = vmul.f32 %v668, %v682
        %v685 = vmul.f32 %v669, %v682
        %v686 = vmul.f32 %v670, %v682
        %v687 = vmul.f32 %v671, %v682
        %v688 = vmul.f32 %v672, %v682
        %v689 = vmul.f32 %v673, %v682
        %v690 = vmul.f32 %v674, %v682
        %v691 = vmul.f32 %v675, %v682
        %v692 = vadd.f32 %v660, %v684
        %v693 = vadd.f32 %v661, %v685
        %v694 = vadd.f32 %v662, %v686
        %v695 = vadd.f32 %v663, %v687
        %v696 = vadd.f32 %v664, %v688
        %v697 = vadd.f32 %v665, %v689
        %v698 = vadd.f32 %v666, %v690
        %v699 = vadd.f32 %v667, %v691
        %v700 = vpack.c.bf16 %v693, %v692
        %v701 = vpack.c.bf16 %v695, %v694
        %v702 = vpack.c.bf16 %v697, %v696
        %v703 = vpack.c.bf16 %v699, %v698
        %v704 = vld [vmem:[%s5] sm:$0xff]
        %v705 = vld [vmem:[%s5 + $0x8] sm:$0xff]
        %v706 = vld [vmem:[%s5 + $0x10] sm:$0xff]
        %v707 = vld [vmem:[%s5 + $0x18] sm:$0xff]
        %v708 = vld [vmem:[%s5 + $0x20] sm:$0xff]
        %v709 = vld [vmem:[%s5 + $0x28] sm:$0xff]
        %v710 = vld [vmem:[%s5 + $0x30] sm:$0xff]
        %v711 = vld [vmem:[%s5 + $0x38] sm:$0xff]
        %v712 = vpack.c.bf16 %v705, %v704
        %v713 = vpack.c.bf16 %v707, %v706
        %v714 = vpack.c.bf16 %v709, %v708
        %v715 = vpack.c.bf16 %v711, %v710
        %v716 = vld [vmem:[%s6] sm:$0x1]
        %v718 = vlaneseq
        %v719 = vshrl.u32 %v718, 7
        %v720 = vsub.s32 0, %v719
        %v721 = vrot.slane %v716, %v720
        %vm723 = vcmask 523264
        %v725 = vsel %vm723, %v700, 0
        %v728 = vsel %vm723, %v701, 0
        %v731 = vsel %vm723, %v702, 0
        %v734 = vsel %vm723, %v703, 0
        %736 = vmatprep.subr.bf16.mxu0 0
        %737 = vmatpush1.bf16.msra.mxu0 %v712
        %738 = vmatprep.subr.bf16.mxu0 0
        %739 = vmatpush1.bf16.msra.mxu0 %v713
        %740 = vmatprep.subr.bf16.mxu0 0
        %741 = vmatpush1.bf16.msra.mxu0 %v714
        %742 = vmatprep.subr.bf16.mxu0 0
        %743 = vmatpush1.bf16.msra.mxu0 %v715
        %744 = vmatprep.subr.bf16.mxu0 0
        %745 = vmatpush1.bf16.msra.mxu0 0
        %746 = vmatprep.subr.bf16.mxu0 0
        %747 = vmatpush1.bf16.msra.mxu0 0
        %748 = vmatprep.subr.bf16.mxu0 0
        %749 = vmatpush1.bf16.msra.mxu0 0
        %750 = vmatprep.subr.bf16.mxu0 0
        %751 = vmatpush1.bf16.msra.mxu0 0
        %752 = vmatprep.subr.bf16.mxu0 0
        %753 = vmatpush1.bf16.msra.mxu0 0
        %754 = vmatprep.subr.bf16.mxu0 0
        %755 = vmatpush1.bf16.msra.mxu0 0
        %756 = vmatprep.subr.bf16.mxu0 0
        %757 = vmatpush1.bf16.msra.mxu0 0
        %758 = vmatprep.subr.bf16.mxu0 0
        %759 = vmatpush1.bf16.msra.mxu0 0
        %760 = vmatprep.subr.bf16.mxu0 0
        %761 = vmatpush1.bf16.msra.mxu0 0
        %762 = vmatprep.subr.bf16.mxu0 0
        %763 = vmatpush1.bf16.msra.mxu0 0
        %764 = vmatprep.subr.bf16.mxu0 0
        %765 = vmatpush1.bf16.msra.mxu0 0
        %766 = vmatprep.subr.bf16.mxu0 0
        %767 = vmatpush1.bf16.msra.mxu0 0
        %768 = vmatprep.mubr.bf16.mxu0 0
        %769 = vmatmul.mubr.bf16.gmra.mrb[0].mxu0 %v725
        %v770 = vpop.f32.mrb[0].mxu0
        %v771 = vadd.f32 %v721, %v770
        %v772 = vpop.f32.mrb[0].mxu0
        %v773 = vpop.f32.mrb[0].mxu0
        %v774 = vadd.f32 %v721, %v773
        %v775 = vpop.f32.mrb[0].mxu0
        %776 = vmatprep.mubr.bf16.mxu0 0
        %777 = vmatmul.mubr.bf16.gmra.mrb[0].mxu0 %v728
        %v778 = vpop.f32.mrb[0].mxu0
        %v779 = vadd.f32 %v721, %v778
        %v780 = vpop.f32.mrb[0].mxu0
        %v781 = vpop.f32.mrb[0].mxu0
        %v782 = vadd.f32 %v721, %v781
        %v783 = vpop.f32.mrb[0].mxu0
        %784 = vmatprep.mubr.bf16.mxu0 0
        %785 = vmatmul.mubr.bf16.gmra.mrb[0].mxu0 %v731
        %v786 = vpop.f32.mrb[0].mxu0
        %v787 = vadd.f32 %v721, %v786
        %v788 = vpop.f32.mrb[0].mxu0
        %v789 = vpop.f32.mrb[0].mxu0
        %v790 = vadd.f32 %v721, %v789
        %v791 = vpop.f32.mrb[0].mxu0
        %792 = vmatprep.mubr.bf16.mxu0 0
        %793 = vmatmul.mubr.bf16.gmra.mrb[0].mxu0 %v734
        %v794 = vpop.f32.mrb[0].mxu0
        %v795 = vadd.f32 %v721, %v794
        %v796 = vpop.f32.mrb[0].mxu0
        %v797 = vpop.f32.mrb[0].mxu0
        %v798 = vadd.f32 %v721, %v797
        %v799 = vpop.f32.mrb[0].mxu0
        %800 = vdwg.mxu0
        %v801 = vmax.f32 %v771, 0.0
        %v802 = vmax.f32 %v774, 0.0
        %v803 = vmax.f32 %v779, 0.0
        %v804 = vmax.f32 %v782, 0.0
        %v805 = vmax.f32 %v787, 0.0
        %v806 = vmax.f32 %v790, 0.0
        %v807 = vmax.f32 %v795, 0.0
        %v808 = vmax.f32 %v798, 0.0
        %809 = vst.msk [vmem:[#allocation2] sm:$0xff] %vm723, 0.0
        %vm810 = vcmask 517120
        %811 = vst.msk [vmem:[#allocation2 + $0x8] sm:$0x3] %vm810, 0.0
        %812 = vst.msk [vmem:[#allocation2 + $0x10] sm:$0xff] %vm723, 0.0
        %813 = vst.msk [vmem:[#allocation2 + $0x18] sm:$0x3] %vm810, 0.0
        %814 = vst.msk [vmem:[#allocation2 + $0x20] sm:$0xff] %vm723, 0.0
        %815 = vst.msk [vmem:[#allocation2 + $0x28] sm:$0x3] %vm810, 0.0
        %816 = vst.msk [vmem:[#allocation2 + $0x30] sm:$0xff] %vm723, 0.0
        %817 = vst.msk [vmem:[#allocation2 + $0x38] sm:$0x3] %vm810, 0.0
        %818 = vst.msk [vmem:[#allocation2 + $0x40] sm:$0xff] %vm723, 0.0
        %819 = vst.msk [vmem:[#allocation2 + $0x48] sm:$0x3] %vm810, 0.0
        %820 = vst.msk [vmem:[#allocation2 + $0x50] sm:$0xff] %vm723, 0.0
        %821 = vst.msk [vmem:[#allocation2 + $0x58] sm:$0x3] %vm810, 0.0
        %822 = vst.msk [vmem:[#allocation2 + $0x60] sm:$0xff] %vm723, 0.0
        %823 = vst.msk [vmem:[#allocation2 + $0x68] sm:$0x3] %vm810, 0.0
        %824 = vst.msk [vmem:[#allocation2 + $0x70] sm:$0xff] %vm723, 0.0
        %825 = vst.msk [vmem:[#allocation2 + $0x78] sm:$0x3] %vm810, 0.0
        %826 = vst.msk [vmem:[#allocation2 + $0x80] sm:$0xff] %vm723, 0.0
        %827 = vst.msk [vmem:[#allocation2 + $0x88] sm:$0x3] %vm810, 0.0
        %828 = vst.msk [vmem:[#allocation2 + $0x90] sm:$0xff] %vm723, 0.0
        %829 = vst.msk [vmem:[#allocation2 + $0x98] sm:$0x3] %vm810, 0.0
        %s830 = scalar_lea.vmem [#allocation2], 16
        %831 = vst.msk [vmem:[%s830 + $0x1] sm:$0xff] %vm723, %v801
        %832 = vst.msk [vmem:[%s830 + $0x11] sm:$0xff] %vm723, %v802
        %833 = vst.msk [vmem:[%s830 + $0x21] sm:$0xff] %vm723, %v803
        %834 = vst.msk [vmem:[%s830 + $0x31] sm:$0xff] %vm723, %v804
        %835 = vst.msk [vmem:[%s830 + $0x41] sm:$0xff] %vm723, %v805
        %836 = vst.msk [vmem:[%s830 + $0x51] sm:$0xff] %vm723, %v806
        %837 = vst.msk [vmem:[%s830 + $0x61] sm:$0xff] %vm723, %v807
        %838 = vst.msk [vmem:[%s830 + $0x71] sm:$0xff] %vm723, %v808
        %v839 = vld [vmem:[#allocation2] sm:$0xff]
        %v840 = vld [vmem:[#allocation2 + $0x10] sm:$0xff]
        %v841 = vld [vmem:[#allocation2 + $0x20] sm:$0xff]
        %v842 = vld [vmem:[#allocation2 + $0x30] sm:$0xff]
        %v843 = vld [vmem:[#allocation2 + $0x40] sm:$0xff]
        %v844 = vld [vmem:[#allocation2 + $0x50] sm:$0xff]
        %v845 = vld [vmem:[#allocation2 + $0x60] sm:$0xff]
        %v846 = vld [vmem:[#allocation2 + $0x70] sm:$0xff]
        %v847 = vld [vmem:[%s7] sm:$0x1]
        %v849 = vlaneseq
        %v850 = vshrl.u32 %v849, 7
        %v851 = vsub.s32 0, %v850
        %v852 = vrot.slane %v847, %v851
        %v854 = vmul.f32 %v839, %v852
        %v855 = vmul.f32 %v840, %v852
        %v856 = vmul.f32 %v841, %v852
        %v857 = vmul.f32 %v842, %v852
        %v858 = vmul.f32 %v843, %v852
        %v859 = vmul.f32 %v844, %v852
        %v860 = vmul.f32 %v845, %v852
        %v861 = vmul.f32 %v846, %v852
        %v862 = vld [vmem:[#allocation2 + $0x1] sm:$0xff]
        %v863 = vld [vmem:[#allocation2 + $0x11] sm:$0xff]
        %v864 = vld [vmem:[#allocation2 + $0x21] sm:$0xff]
        %v865 = vld [vmem:[#allocation2 + $0x31] sm:$0xff]
        %v866 = vld [vmem:[#allocation2 + $0x41] sm:$0xff]
        %v867 = vld [vmem:[#allocation2 + $0x51] sm:$0xff]
        %v868 = vld [vmem:[#allocation2 + $0x61] sm:$0xff]
        %v869 = vld [vmem:[#allocation2 + $0x71] sm:$0xff]
        %s870 = scalar_lea.vmem %s7, 1
        %v871 = vld [vmem:[%s870] sm:$0x1]
        %v873 = vlaneseq
        %v874 = vshrl.u32 %v873, 7
        %v875 = vsub.s32 0, %v874
        %v876 = vrot.slane %v871, %v875
        %v878 = vmul.f32 %v862, %v876
        %v879 = vmul.f32 %v863, %v876
        %v880 = vmul.f32 %v864, %v876
        %v881 = vmul.f32 %v865, %v876
        %v882 = vmul.f32 %v866, %v876
        %v883 = vmul.f32 %v867, %v876
        %v884 = vmul.f32 %v868, %v876
        %v885 = vmul.f32 %v869, %v876
        %v886 = vadd.f32 %v854, %v878
        %v887 = vadd.f32 %v855, %v879
        %v888 = vadd.f32 %v856, %v880
        %v889 = vadd.f32 %v857, %v881
        %v890 = vadd.f32 %v858, %v882
        %v891 = vadd.f32 %v859, %v883
        %v892 = vadd.f32 %v860, %v884
        %v893 = vadd.f32 %v861, %v885
        %v894 = vld [vmem:[#allocation2 + $0x2] sm:$0xff]
        %v895 = vld [vmem:[#allocation2 + $0x12] sm:$0xff]
        %v896 = vld [vmem:[#allocation2 + $0x22] sm:$0xff]
        %v897 = vld [vmem:[#allocation2 + $0x32] sm:$0xff]
        %v898 = vld [vmem:[#allocation2 + $0x42] sm:$0xff]
        %v899 = vld [vmem:[#allocation2 + $0x52] sm:$0xff]
        %v900 = vld [vmem:[#allocation2 + $0x62] sm:$0xff]
        %v901 = vld [vmem:[#allocation2 + $0x72] sm:$0xff]
        %s902 = scalar_lea.vmem %s7, 2
        %v903 = vld [vmem:[%s902] sm:$0x1]
        %v905 = vlaneseq
        %v906 = vshrl.u32 %v905, 7
        %v907 = vsub.s32 0, %v906
        %v908 = vrot.slane %v903, %v907
        %v910 = vmul.f32 %v894, %v908
        %v911 = vmul.f32 %v895, %v908
        %v912 = vmul.f32 %v896, %v908
        %v913 = vmul.f32 %v897, %v908
        %v914 = vmul.f32 %v898, %v908
        %v915 = vmul.f32 %v899, %v908
        %v916 = vmul.f32 %v900, %v908
        %v917 = vmul.f32 %v901, %v908
        %v918 = vadd.f32 %v886, %v910
        %v919 = vadd.f32 %v887, %v911
        %v920 = vadd.f32 %v888, %v912
        %v921 = vadd.f32 %v889, %v913
        %v922 = vadd.f32 %v890, %v914
        %v923 = vadd.f32 %v891, %v915
        %v924 = vadd.f32 %v892, %v916
        %v925 = vadd.f32 %v893, %v917
        %v926 = vld [vmem:[%s830] sm:$0xff]
        %v927 = vld [vmem:[%s830 + $0x10] sm:$0xff]
        %v928 = vld [vmem:[%s830 + $0x20] sm:$0xff]
        %v929 = vld [vmem:[%s830 + $0x30] sm:$0xff]
        %v930 = vld [vmem:[%s830 + $0x40] sm:$0xff]
        %v931 = vld [vmem:[%s830 + $0x50] sm:$0xff]
        %v932 = vld [vmem:[%s830 + $0x60] sm:$0xff]
        %v933 = vld [vmem:[%s830 + $0x70] sm:$0xff]
        %s934 = scalar_lea.vmem %s7, 3
        %v935 = vld [vmem:[%s934] sm:$0x1]
        %v937 = vlaneseq
        %v938 = vshrl.u32 %v937, 7
        %v939 = vsub.s32 0, %v938
        %v940 = vrot.slane %v935, %v939
        %v942 = vmul.f32 %v926, %v940
        %v943 = vmul.f32 %v927, %v940
        %v944 = vmul.f32 %v928, %v940
        %v945 = vmul.f32 %v929, %v940
        %v946 = vmul.f32 %v930, %v940
        %v947 = vmul.f32 %v931, %v940
        %v948 = vmul.f32 %v932, %v940
        %v949 = vmul.f32 %v933, %v940
        %v950 = vadd.f32 %v918, %v942
        %v951 = vadd.f32 %v919, %v943
        %v952 = vadd.f32 %v920, %v944
        %v953 = vadd.f32 %v921, %v945
        %v954 = vadd.f32 %v922, %v946
        %v955 = vadd.f32 %v923, %v947
        %v956 = vadd.f32 %v924, %v948
        %v957 = vadd.f32 %v925, %v949
        %v958 = vld [vmem:[%s830 + $0x1] sm:$0xff]
        %v959 = vld [vmem:[%s830 + $0x11] sm:$0xff]
        %v960 = vld [vmem:[%s830 + $0x21] sm:$0xff]
        %v961 = vld [vmem:[%s830 + $0x31] sm:$0xff]
        %v962 = vld [vmem:[%s830 + $0x41] sm:$0xff]
        %v963 = vld [vmem:[%s830 + $0x51] sm:$0xff]
        %v964 = vld [vmem:[%s830 + $0x61] sm:$0xff]
        %v965 = vld [vmem:[%s830 + $0x71] sm:$0xff]
        %s966 = scalar_lea.vmem %s7, 4
        %v967 = vld [vmem:[%s966] sm:$0x1]
        %v969 = vlaneseq
        %v970 = vshrl.u32 %v969, 7
        %v971 = vsub.s32 0, %v970
        %v972 = vrot.slane %v967, %v971
        %v974 = vmul.f32 %v958, %v972
        %v975 = vmul.f32 %v959, %v972
        %v976 = vmul.f32 %v960, %v972
        %v977 = vmul.f32 %v961, %v972
        %v978 = vmul.f32 %v962, %v972
        %v979 = vmul.f32 %v963, %v972
        %v980 = vmul.f32 %v964, %v972
        %v981 = vmul.f32 %v965, %v972
        %v982 = vadd.f32 %v950, %v974
        %v983 = vadd.f32 %v951, %v975
        %v984 = vadd.f32 %v952, %v976
        %v985 = vadd.f32 %v953, %v977
        %v986 = vadd.f32 %v954, %v978
        %v987 = vadd.f32 %v955, %v979
        %v988 = vadd.f32 %v956, %v980
        %v989 = vadd.f32 %v957, %v981
        %v990 = vld [vmem:[%s830 + $0x2] sm:$0xff]
        %v991 = vld [vmem:[%s830 + $0x12] sm:$0xff]
        %v992 = vld [vmem:[%s830 + $0x22] sm:$0xff]
        %v993 = vld [vmem:[%s830 + $0x32] sm:$0xff]
        %v994 = vld [vmem:[%s830 + $0x42] sm:$0xff]
        %v995 = vld [vmem:[%s830 + $0x52] sm:$0xff]
        %v996 = vld [vmem:[%s830 + $0x62] sm:$0xff]
        %v997 = vld [vmem:[%s830 + $0x72] sm:$0xff]
        %s998 = scalar_lea.vmem %s7, 5
        %v999 = vld [vmem:[%s998] sm:$0x1]
        %v1001 = vlaneseq
        %v1002 = vshrl.u32 %v1001, 7
        %v1003 = vsub.s32 0, %v1002
        %v1004 = vrot.slane %v999, %v1003
        %v1006 = vmul.f32 %v990, %v1004
        %v1007 = vmul.f32 %v991, %v1004
        %v1008 = vmul.f32 %v992, %v1004
        %v1009 = vmul.f32 %v993, %v1004
        %v1010 = vmul.f32 %v994, %v1004
        %v1011 = vmul.f32 %v995, %v1004
        %v1012 = vmul.f32 %v996, %v1004
        %v1013 = vmul.f32 %v997, %v1004
        %v1014 = vadd.f32 %v982, %v1006
        %v1015 = vadd.f32 %v983, %v1007
        %v1016 = vadd.f32 %v984, %v1008
        %v1017 = vadd.f32 %v985, %v1009
        %v1018 = vadd.f32 %v986, %v1010
        %v1019 = vadd.f32 %v987, %v1011
        %v1020 = vadd.f32 %v988, %v1012
        %v1021 = vadd.f32 %v989, %v1013
        %s1022 = scalar_lea.vmem [#allocation2], 32
        %v1023 = vld [vmem:[%s1022] sm:$0xff]
        %v1024 = vld [vmem:[%s1022 + $0x10] sm:$0xff]
        %v1025 = vld [vmem:[%s1022 + $0x20] sm:$0xff]
        %v1026 = vld [vmem:[%s1022 + $0x30] sm:$0xff]
        %v1027 = vld [vmem:[%s1022 + $0x40] sm:$0xff]
        %v1028 = vld [vmem:[%s1022 + $0x50] sm:$0xff]
        %v1029 = vld [vmem:[%s1022 + $0x60] sm:$0xff]
        %v1030 = vld [vmem:[%s1022 + $0x70] sm:$0xff]
        %s1031 = scalar_lea.vmem %s7, 6
        %v1032 = vld [vmem:[%s1031] sm:$0x1]
        %v1034 = vlaneseq
        %v1035 = vshrl.u32 %v1034, 7
        %v1036 = vsub.s32 0, %v1035
        %v1037 = vrot.slane %v1032, %v1036
        %v1039 = vmul.f32 %v1023, %v1037
        %v1040 = vmul.f32 %v1024, %v1037
        %v1041 = vmul.f32 %v1025, %v1037
        %v1042 = vmul.f32 %v1026, %v1037
        %v1043 = vmul.f32 %v1027, %v1037
        %v1044 = vmul.f32 %v1028, %v1037
        %v1045 = vmul.f32 %v1029, %v1037
        %v1046 = vmul.f32 %v1030, %v1037
        %v1047 = vadd.f32 %v1014, %v1039
        %v1048 = vadd.f32 %v1015, %v1040
        %v1049 = vadd.f32 %v1016, %v1041
        %v1050 = vadd.f32 %v1017, %v1042
        %v1051 = vadd.f32 %v1018, %v1043
        %v1052 = vadd.f32 %v1019, %v1044
        %v1053 = vadd.f32 %v1020, %v1045
        %v1054 = vadd.f32 %v1021, %v1046
        %v1055 = vld [vmem:[%s1022 + $0x1] sm:$0xff]
        %v1056 = vld [vmem:[%s1022 + $0x11] sm:$0xff]
        %v1057 = vld [vmem:[%s1022 + $0x21] sm:$0xff]
        %v1058 = vld [vmem:[%s1022 + $0x31] sm:$0xff]
        %v1059 = vld [vmem:[%s1022 + $0x41] sm:$0xff]
        %v1060 = vld [vmem:[%s1022 + $0x51] sm:$0xff]
        %v1061 = vld [vmem:[%s1022 + $0x61] sm:$0xff]
        %v1062 = vld [vmem:[%s1022 + $0x71] sm:$0xff]
        %s1063 = scalar_lea.vmem %s7, 7
        %v1064 = vld [vmem:[%s1063] sm:$0x1]
        %v1066 = vlaneseq
        %v1067 = vshrl.u32 %v1066, 7
        %v1068 = vsub.s32 0, %v1067
        %v1069 = vrot.slane %v1064, %v1068
        %v1071 = vmul.f32 %v1055, %v1069
        %v1072 = vmul.f32 %v1056, %v1069
        %v1073 = vmul.f32 %v1057, %v1069
        %v1074 = vmul.f32 %v1058, %v1069
        %v1075 = vmul.f32 %v1059, %v1069
        %v1076 = vmul.f32 %v1060, %v1069
        %v1077 = vmul.f32 %v1061, %v1069
        %v1078 = vmul.f32 %v1062, %v1069
        %v1079 = vadd.f32 %v1047, %v1071
        %v1080 = vadd.f32 %v1048, %v1072
        %v1081 = vadd.f32 %v1049, %v1073
        %v1082 = vadd.f32 %v1050, %v1074
        %v1083 = vadd.f32 %v1051, %v1075
        %v1084 = vadd.f32 %v1052, %v1076
        %v1085 = vadd.f32 %v1053, %v1077
        %v1086 = vadd.f32 %v1054, %v1078
        %v1087 = vld [vmem:[%s1022 + $0x2] sm:$0xff]
        %v1088 = vld [vmem:[%s1022 + $0x12] sm:$0xff]
        %v1089 = vld [vmem:[%s1022 + $0x22] sm:$0xff]
        %v1090 = vld [vmem:[%s1022 + $0x32] sm:$0xff]
        %v1091 = vld [vmem:[%s1022 + $0x42] sm:$0xff]
        %v1092 = vld [vmem:[%s1022 + $0x52] sm:$0xff]
        %v1093 = vld [vmem:[%s1022 + $0x62] sm:$0xff]
        %v1094 = vld [vmem:[%s1022 + $0x72] sm:$0xff]
        %s1095 = scalar_lea.vmem %s7, 8
        %v1096 = vld [vmem:[%s1095] sm:$0x1]
        %v1098 = vlaneseq
        %v1099 = vshrl.u32 %v1098, 7
        %v1100 = vsub.s32 0, %v1099
        %v1101 = vrot.slane %v1096, %v1100
        %v1103 = vmul.f32 %v1087, %v1101
        %v1104 = vmul.f32 %v1088, %v1101
        %v1105 = vmul.f32 %v1089, %v1101
        %v1106 = vmul.f32 %v1090, %v1101
        %v1107 = vmul.f32 %v1091, %v1101
        %v1108 = vmul.f32 %v1092, %v1101
        %v1109 = vmul.f32 %v1093, %v1101
        %v1110 = vmul.f32 %v1094, %v1101
        %v1111 = vadd.f32 %v1079, %v1103
        %v1112 = vadd.f32 %v1080, %v1104
        %v1113 = vadd.f32 %v1081, %v1105
        %v1114 = vadd.f32 %v1082, %v1106
        %v1115 = vadd.f32 %v1083, %v1107
        %v1116 = vadd.f32 %v1084, %v1108
        %v1117 = vadd.f32 %v1085, %v1109
        %v1118 = vadd.f32 %v1086, %v1110
        %v1119 = vpack.c.bf16 %v1112, %v1111
        %v1120 = vpack.c.bf16 %v1114, %v1113
        %v1121 = vpack.c.bf16 %v1116, %v1115
        %v1122 = vpack.c.bf16 %v1118, %v1117
        %v1123 = vld [vmem:[%s8] sm:$0xff]
        %v1124 = vld [vmem:[%s8 + $0x8] sm:$0xff]
        %v1125 = vld [vmem:[%s8 + $0x10] sm:$0xff]
        %v1126 = vld [vmem:[%s8 + $0x18] sm:$0xff]
        %v1127 = vld [vmem:[%s8 + $0x20] sm:$0xff]
        %v1128 = vld [vmem:[%s8 + $0x28] sm:$0xff]
        %v1129 = vld [vmem:[%s8 + $0x30] sm:$0xff]
        %v1130 = vld [vmem:[%s8 + $0x38] sm:$0xff]
        %v1131 = vpack.c.bf16 %v1124, %v1123
        %v1132 = vpack.c.bf16 %v1126, %v1125
        %v1133 = vpack.c.bf16 %v1128, %v1127
        %v1134 = vpack.c.bf16 %v1130, %v1129
        %v1135 = vld [vmem:[%s9] sm:$0x1]
        %v1137 = vlaneseq
        %v1138 = vshrl.u32 %v1137, 7
        %v1139 = vsub.s32 0, %v1138
        %v1140 = vrot.slane %v1135, %v1139
        %v1143 = vsel %vm723, %v1119, 0
        %v1146 = vsel %vm723, %v1120, 0
        %v1149 = vsel %vm723, %v1121, 0
        %v1152 = vsel %vm723, %v1122, 0
        %1154 = vmatprep.subr.bf16.mxu0 0
        %1155 = vmatpush1.bf16.msra.mxu0 %v1131
        %1156 = vmatprep.subr.bf16.mxu0 0
        %1157 = vmatpush1.bf16.msra.mxu0 %v1132
        %1158 = vmatprep.subr.bf16.mxu0 0
        %1159 = vmatpush1.bf16.msra.mxu0 %v1133
        %1160 = vmatprep.subr.bf16.mxu0 0
        %1161 = vmatpush1.bf16.msra.mxu0 %v1134
        %1162 = vmatprep.subr.bf16.mxu0 0
        %1163 = vmatpush1.bf16.msra.mxu0 0
        %1164 = vmatprep.subr.bf16.mxu0 0
        %1165 = vmatpush1.bf16.msra.mxu0 0
        %1166 = vmatprep.subr.bf16.mxu0 0
        %1167 = vmatpush1.bf16.msra.mxu0 0
        %1168 = vmatprep.subr.bf16.mxu0 0
        %1169 = vmatpush1.bf16.msra.mxu0 0
        %1170 = vmatprep.subr.bf16.mxu0 0
        %1171 = vmatpush1.bf16.msra.mxu0 0
        %1172 = vmatprep.subr.bf16.mxu0 0
        %1173 = vmatpush1.bf16.msra.mxu0 0
        %1174 = vmatprep.subr.bf16.mxu0 0
        %1175 = vmatpush1.bf16.msra.mxu0 0
        %1176 = vmatprep.subr.bf16.mxu0 0
        %1177 = vmatpush1.bf16.msra.mxu0 0
        %1178 = vmatprep.subr.bf16.mxu0 0
        %1179 = vmatpush1.bf16.msra.mxu0 0
        %1180 = vmatprep.subr.bf16.mxu0 0
        %1181 = vmatpush1.bf16.msra.mxu0 0
        %1182 = vmatprep.subr.bf16.mxu0 0
        %1183 = vmatpush1.bf16.msra.mxu0 0
        %1184 = vmatprep.subr.bf16.mxu0 0
        %1185 = vmatpush1.bf16.msra.mxu0 0
        %1186 = vmatprep.mubr.bf16.mxu0 0
        %1187 = vmatmul.mubr.bf16.gmra.mrb[0].mxu0 %v1143
        %v1188 = vpop.f32.mrb[0].mxu0
        %v1189 = vadd.f32 %v1140, %v1188
        %v1190 = vpop.f32.mrb[0].mxu0
        %v1191 = vpop.f32.mrb[0].mxu0
        %v1192 = vadd.f32 %v1140, %v1191
        %v1193 = vpop.f32.mrb[0].mxu0
        %1194 = vmatprep.mubr.bf16.mxu0 0
        %1195 = vmatmul.mubr.bf16.gmra.mrb[0].mxu0 %v1146
        %v1196 = vpop.f32.mrb[0].mxu0
        %v1197 = vadd.f32 %v1140, %v1196
        %v1198 = vpop.f32.mrb[0].mxu0
        %v1199 = vpop.f32.mrb[0].mxu0
        %v1200 = vadd.f32 %v1140, %v1199
        %v1201 = vpop.f32.mrb[0].mxu0
        %1202 = vmatprep.mubr.bf16.mxu0 0
        %1203 = vmatmul.mubr.bf16.gmra.mrb[0].mxu0 %v1149
        %v1204 = vpop.f32.mrb[0].mxu0
        %v1205 = vadd.f32 %v1140, %v1204
        %v1206 = vpop.f32.mrb[0].mxu0
        %v1207 = vpop.f32.mrb[0].mxu0
        %v1208 = vadd.f32 %v1140, %v1207
        %v1209 = vpop.f32.mrb[0].mxu0
        %1210 = vmatprep.mubr.bf16.mxu0 0
        %1211 = vmatmul.mubr.bf16.gmra.mrb[0].mxu0 %v1152
        %v1212 = vpop.f32.mrb[0].mxu0
        %v1213 = vadd.f32 %v1140, %v1212
        %v1214 = vpop.f32.mrb[0].mxu0
        %v1215 = vpop.f32.mrb[0].mxu0
        %v1216 = vadd.f32 %v1140, %v1215
        %v1217 = vpop.f32.mrb[0].mxu0
        %1218 = vdwg.mxu0
        %v1219 = vmax.f32 %v1189, 0.0
        %v1220 = vmax.f32 %v1192, 0.0
        %v1221 = vmax.f32 %v1197, 0.0
        %v1222 = vmax.f32 %v1200, 0.0
        %v1223 = vmax.f32 %v1205, 0.0
        %v1224 = vmax.f32 %v1208, 0.0
        %v1225 = vmax.f32 %v1213, 0.0
        %v1226 = vmax.f32 %v1216, 0.0
        %1227 = vst [vmem:[%s397] sm:$0xff] %v1219
        %1228 = vst [vmem:[%s397 + $0x8] sm:$0xff] %v1220
        %1229 = vst [vmem:[%s397 + $0x10] sm:$0xff] %v1221
        %1230 = vst [vmem:[%s397 + $0x18] sm:$0xff] %v1222
        %1231 = vst [vmem:[%s397 + $0x20] sm:$0xff] %v1223
        %1232 = vst [vmem:[%s397 + $0x28] sm:$0xff] %v1224
        %1233 = vst [vmem:[%s397 + $0x30] sm:$0xff] %v1225
        %1234 = vst [vmem:[%s397 + $0x38] sm:$0xff] %v1226
        %s1235 = sand.u32 %s262, 1
        %s1236 = scalar_lea.sflag [#allocation4], %s1235
        %s1237 = sand.u32 %s262, 1
        %s1238 = smul.addr %s1237, 64
        %s1239 = scalar_lea.vmem [#allocation3], %s1238
        // Predicated region
        $region61: #{sepconv_forward.1} parent=59 // pred_check
          %p1240 = pneg %p272
        $region62: #{sepconv_forward.1} parent=59 // pred_check_branch
          %1242 = sbr.rel (%p1240) target = $region64
        $region63: #{sepconv_forward.1} parent=59 // pred_region
          %s1244 = ssub.s32 1024, 1024
          %1245 = vsyncadd %s1236, %s1244
          %s1246 = smul.addr %s24, 8
          %s1247 = smul.addr %s1246, 128
          %s1248 = scalar_lea.hbm %s10, %s1247
          %s1249 = sshll.u32 %s1239, 4
          %s1250 = int_to_ptr.vmem [resolvable:$true] %s1249
          %1255 = dma.vmem_to_hbm [thread:$0]  %s1250, 1024, %s1248, %s1236, 128, 128, 8
        $region64: #{sepconv_forward.1} parent=59 // pred_fallthru
          _
      $region60: #{sepconv_forward.1} parent=5 // pred_fallthru
        _
      %p1256 = scmp.le.s32.totalorder 2, %s19
      // Predicated region
      $region65: #{sepconv_forward.1} parent=5 // pred_check
        %p1257 = pneg %p1256
      $region66: #{sepconv_forward.1} parent=5 // pred_check_branch
        %1259 = sbr.rel (%p1257) target = $region68
      $region67: #{sepconv_forward.1} parent=5 // pred_region
        %s1260 = ssub.s32 %s19, 2
        // Predicated region
        $region69: #{sepconv_forward.1} parent=67 // pred_check
          %p1261 = pneg %p278
        $region70: #{sepconv_forward.1} parent=67 // pred_check_branch
          %1263 = sbr.rel (%p1261) target = $region72
        $region71: #{sepconv_forward.1} parent=67 // pred_region
          %s1264 = sand.u32 %s263, 1
          %s1265 = scalar_lea.sflag [#allocation4], %s1264
          %s1266 = sand.u32 %s263, 1
          %s1267 = smul.addr %s1266, 64
          %s1268 = scalar_lea.vmem [#allocation3], %s1267
          %1269 = dma.done %s1265, 1024
        $region72: #{sepconv_forward.1} parent=67 // pred_fallthru
          _
      $region68: #{sepconv_forward.1} parent=5 // pred_fallthru
        _
    $region6: #{sepconv_forward.1} parent=1 // loop_footer
      %s23 = sadd.s32 1, %s19
    $region7: #{sepconv_forward.1} parent=1 // loop_footer_branch
      %18 = sbr.rel target = $region3
    $region8: #{sepconv_forward.1} parent=1 // loop_exit
      _
    %1270 = vsyncpa [#allocation4], 1
    %s1271 = scalar_lea.sflag [#allocation4], 1
    %1272 = vsyncpa %s1271, 1

</llo_original>
